<compile_context>
chip_gen: v5e
topology: v5e:2x2
jax: 0.10.0
libtpu: 0.0.40
codegen_flags: <defaults>
</compile_context>

<pallas_src>
import functools
import math

import jax
import jax.numpy as jnp
from jax.experimental import pallas as pl
from jax.experimental.pallas import tpu as pltpu


# ----------------------------------------------------------------------------
# Fused bidirectional multi-layer LSTM encoder kernel.
#
# Packed gate/lane layout (PyTorch gate order i, f, g, o; H lanes per block):
#   columns of every (.., 8H) tensor = [i_f, i_b, f_f, f_b, g_f, g_b, o_f, o_b]
#   i/f/o columns are pre-scaled by 0.5 at pack time (sigmoid = 0.5*tanh(x/2)+0.5).
# Hidden/cell lane layout: [0:H] forward state, [H:2H] backward state.
#
# refs (in order):
#   xp0   : (seq*Bp, 8H) f32   layer-0 gate pre-activations (embedding + wih0
#                              + b0 already folded in the wrapper)
#   whh0  : (2H, 8H)     bf16  layer-0 recurrent weights (block-diag over dir)
#   then for every layer l >= 1:  wih_l (2H,8H) bf16, whh_l (2H,8H) bf16,
#                                 b_l (1,8H) f32
#   out   : (Bp, 4H)     f32   encoding = cat(outputs[0], outputs[-1], -1)
# ----------------------------------------------------------------------------
def _birnn_encoder_kernel(*refs, seq_len, Bp, H, num_layers):
    H2, H4, H6, H8 = 2 * H, 4 * H, 6 * H, 8 * H
    out_ref = refs[-1]
    xp0_ref, whh0_ref = refs[0], refs[1]
    layer_refs = refs[2:2 + 3 * (num_layers - 1)]

    # Static lane masks, computed once.
    lane8 = jax.lax.broadcasted_iota(jnp.int32, (1, H8), 1)
    fwd_mask = (lane8 % H2) < H                 # forward half of each gate pair
    g_mask = (lane8 >= H4) & (lane8 < H6)       # cell-candidate (tanh) gate
    half_mask = jax.lax.broadcasted_iota(jnp.int32, (1, H2), 1) < H

    def merge_directions(xp):
        # xp: (seq*Bp, 8H).  Forward lanes read time s, backward lanes read
        # time seq-1-s.  Pure function of xp -> hoisted out of the serial loop.
        blocks = [xp[s * Bp:(s + 1) * Bp, :] for s in range(seq_len)]
        return [jnp.where(fwd_mask, blocks[s], blocks[seq_len - 1 - s])
                for s in range(seq_len)]

    def run_layer(xsel, whh):
        # Serial bidirectional LSTM recurrence on the packed 8H gate tile.
        h = jnp.zeros((Bp, H2), jnp.float32)
        c = jnp.zeros((Bp, H2), jnp.float32)
        hs = []
        for s in range(seq_len):
            pre = xsel[s]
            if s > 0:   # h == 0 at step 0: skip the dead MXU round trip
                pre = pre + jnp.dot(h.astype(jnp.bfloat16), whh,
                                    preferred_element_type=jnp.float32)
            # Single tanh over the packed tile; the x/2 of the sigmoid identity
            # is already folded into the i/f/o weight columns.
            t = jnp.tanh(pre)
            act = jnp.where(g_mask, t, 0.5 * t + 0.5)
            i_g = act[:, 0:H2]
            f_g = act[:, H2:H4]
            g_g = act[:, H4:H6]
            o_g = act[:, H6:H8]
            c = f_g * c + i_g * g_g
            h = o_g * jnp.tanh(c)
            hs.append(h)            # register-resident; no per-step stores
        # hs[s][:, :H] = fwd h(t=s);  hs[s][:, H:] = bwd h(t=seq-1-s)
        return hs

    # ---- layer 0 (input projection folded into the embedding, in wrapper) ---
    hs = run_layer(merge_directions(xp0_ref[...]), whh0_ref[...])

    # ---- layers 1 .. L-1 ----------------------------------------------------
    for l in range(num_layers - 1):
        wih_ref, whh_ref, b_ref = layer_refs[3 * l:3 * l + 3]
        # Layer output at time t: [fwd h(t) | bwd h(t)].
        ys = [jnp.where(half_mask, hs[t], hs[seq_len - 1 - t])
              for t in range(seq_len)]
        y_all = jnp.concatenate(ys, axis=0)                      # (seq*Bp, 2H)
        # Input projection for ALL timesteps & both directions: one matmul,
        # bias folded in, hoisted out of the recurrence.
        xp = jnp.dot(y_all.astype(jnp.bfloat16), wih_ref[...],
                     preferred_element_type=jnp.float32) + b_ref[...]
        hs = run_layer(merge_directions(xp), whh_ref[...])

    # ---- epilogue: encoding = cat(outputs[0], outputs[-1], -1) --------------
    y_first = jnp.where(half_mask, hs[0], hs[seq_len - 1])       # outputs[0]
    y_last = jnp.where(half_mask, hs[seq_len - 1], hs[0])        # outputs[-1]
    out_ref[...] = jnp.concatenate([y_first, y_last], axis=-1)   # (Bp, 4H)


# ----------------------------------------------------------------------------
# Full BiRNN forward.  Embedding gather and the tiny (4H -> 2) decoder stay in
# XLA glue inside the same jit — a dedicated launch for them is pure overhead.
# ----------------------------------------------------------------------------
def birnn_forward(inputs, params, num_layers):
    # inputs: (batch, seq_len) int32 ; matches inputs.permute(1, 0) in PyTorch.
    batch, seq_len = inputs.shape
    H = params["whh"][0].shape[0] // 2
    Bp = ((batch + 7) // 8) * 8      # pad batch to full 8-sublane tiles

    # Fold the embedding into the layer-0 input projection (exact rewrite):
    #   E_proj[v, :] = embedding[v, :] @ wih0 + b0     -> (vocab, 8H)
    e_proj = jnp.dot(params["embedding"].astype(jnp.bfloat16), params["wih"][0],
                     preferred_element_type=jnp.float32) + params["b"][0]

    tok = jnp.pad(inputs.T, ((0, 0), (0, Bp - batch)))           # (seq, Bp)
    xp0 = jnp.take(e_proj, tok, axis=0).reshape(seq_len * Bp, 8 * H)

    operands = [xp0, params["whh"][0]]
    for l in range(1, num_layers):
        operands += [params["wih"][l], params["whh"][l], params["b"][l]]

    kernel = functools.partial(_birnn_encoder_kernel, seq_len=seq_len, Bp=Bp,
                               H=H, num_layers=num_layers)
    enc = pl.pallas_call(
        kernel,
        out_shape=jax.ShapeDtypeStruct((Bp, 4 * H), jnp.float32),
        in_specs=[pl.BlockSpec(memory_space=pltpu.MemorySpace.VMEM)]
        * len(operands),
        out_specs=pl.BlockSpec(memory_space=pltpu.MemorySpace.VMEM),
    )(*operands)

    # encoding = cat(outputs[0], outputs[-1], -1) ; decoder is ~512 FLOPs.
    return enc[:batch] @ params["dec_w"] + params["dec_b"]


# ----------------------------------------------------------------------------
# Parameter init (PyTorch-like uniform) + packing into the fused lane layout.
# ----------------------------------------------------------------------------
def _pack_bidir(wih_f, whh_f, b_f, wih_b, whh_b, b_b, H):
    """Pack per-direction (.., 4H) params into the gate-interleaved 8H layout,
    folding the 0.5 sigmoid pre-scale into the i/f/o columns."""
    gate_scale = jnp.array([0.5, 0.5, 1.0, 0.5], jnp.float32)[:, None]  # i,f,g,o

    def interleave(a_f, a_b):
        lead = a_f.shape[:-1]
        af = a_f.reshape(*lead, 4, H) * gate_scale
        ab = a_b.reshape(*lead, 4, H) * gate_scale
        return jnp.stack([af, ab], axis=-2).reshape(*lead, 8 * H)

    wih = interleave(wih_f, wih_b)                                  # (in, 8H)
    b = interleave(b_f, b_b)                                        # (1, 8H)
    whh = jnp.concatenate(
        [interleave(whh_f, jnp.zeros_like(whh_b)),                  # fwd rows
         interleave(jnp.zeros_like(whh_f), whh_b)], axis=0)         # bwd rows
    return wih, whh, b                                              # whh: (2H,8H)


def init_params(key, vocab_size, embed_size, num_hiddens, num_layers):
    H = num_hiddens
    bound = 1.0 / math.sqrt(H)

    def uni(k, shape):
        return jax.random.uniform(k, shape, jnp.float32, -bound, bound)

    keys = iter(jax.random.split(key, 1 + num_layers * 8 + 2))

    params = {
        "embedding": jax.random.normal(next(keys),
                                       (vocab_size, embed_size), jnp.float32),
        "wih": [], "whh": [], "b": [],
    }
    for l in range(num_layers):
        in_dim = embed_size if l == 0 else 2 * H
        # per-direction params, gate order i, f, g, o along the 4H axis;
        # b_ih and b_hh drawn independently and summed (PyTorch parity).
        wih_f = uni(next(keys), (in_dim, 4 * H))
        whh_f = uni(next(keys), (H, 4 * H))
        b_f = uni(next(keys), (1, 4 * H)) + uni(next(keys), (1, 4 * H))
        wih_b = uni(next(keys), (in_dim, 4 * H))
        whh_b = uni(next(keys), (H, 4 * H))
        b_b = uni(next(keys), (1, 4 * H)) + uni(next(keys), (1, 4 * H))
        wih, whh, b = _pack_bidir(wih_f, whh_f, b_f, wih_b, whh_b, b_b, H)
        params["wih"].append(wih.astype(jnp.bfloat16))   # bf16 MXU operands
        params["whh"].append(whh.astype(jnp.bfloat16))
        params["b"].append(b)                            # bias stays f32
    dec_bound = 1.0 / math.sqrt(4 * H)
    params["dec_w"] = jax.random.uniform(next(keys), (4 * H, 2), jnp.float32,
                                         -dec_bound, dec_bound)
    params["dec_b"] = jax.random.uniform(next(keys), (1, 2), jnp.float32,
                                         -dec_bound, dec_bound)
    return params


if __name__ == "__main__":
    vocab_size = 50
    embed_size = 16
    num_hiddens = 32
    num_layers = 2
    batch, seq_len = 2, 8

    key = jax.random.PRNGKey(0)
    k_params, k_inputs = jax.random.split(key)
    params = init_params(k_params, vocab_size, embed_size,
                         num_hiddens, num_layers)
    inputs = jax.random.randint(k_inputs, (batch, seq_len), 0, vocab_size,
                                dtype=jnp.int32)

    fwd = jax.jit(functools.partial(birnn_forward, num_layers=num_layers))
    outs = fwd(inputs, params)
    jax.block_until_ready(outs)
    assert outs.shape == (batch, 2)
    assert outs.dtype == jnp.float32
    assert bool(jnp.all(jnp.isfinite(outs)))
    print("KERNEL_OK")
</pallas_src>

<mosaic_0001>
module attributes {stable_mosaic.version = 11 : i64} {
  func.func @_birnn_encoder_kernel(%arg0: memref<64x256xf32, #tpu.memory_space<vmem>>, %arg1: memref<64x256xbf16, #tpu.memory_space<vmem>>, %arg2: memref<64x256xbf16, #tpu.memory_space<vmem>>, %arg3: memref<64x256xbf16, #tpu.memory_space<vmem>>, %arg4: memref<1x256xf32, #tpu.memory_space<vmem>>, %arg5: memref<8x128xf32, #tpu.memory_space<vmem>>) attributes {dimension_semantics = [], scalar_prefetch = 0 : i64, scratch_operands = 0 : i64, tpu.core_type = #tpu.core_type<tc>} {
    %0 = tpu.iota {dimensions = array<i32: 1>} : vector<1x256xi32>
    %c64_i32 = arith.constant 64 : i32
    %c0_i32 = arith.constant 0 : i32
    %1 = arith.cmpi eq, %c64_i32, %c0_i32 : i32
    %c1_i32 = arith.constant 1 : i32
    %2 = arith.select %1, %c1_i32, %c64_i32 : i32
    %3 = vector.broadcast %2 : i32 to vector<1x256xi32>
    %4 = arith.remsi %0, %3 : vector<1x256xi32>
    %c0_i32_0 = arith.constant 0 : i32
    %5 = vector.broadcast %c0_i32_0 : i32 to vector<1x256xi32>
    %6 = arith.cmpi ne, %4, %5 : vector<1x256xi32>
    %c0_i32_1 = arith.constant 0 : i32
    %7 = vector.broadcast %c0_i32_1 : i32 to vector<1x256xi32>
    %8 = arith.cmpi slt, %4, %7 : vector<1x256xi32>
    %c0_i32_2 = arith.constant 0 : i32
    %9 = arith.cmpi slt, %2, %c0_i32_2 : i32
    %10 = vector.broadcast %9 : i1 to vector<1x256xi1>
    %11 = vector.broadcast %10 : vector<1x256xi1> to vector<1x256xi1>
    %12 = arith.xori %8, %11 : vector<1x256xi1>
    %13 = arith.andi %12, %6 : vector<1x256xi1>
    %14 = vector.broadcast %2 : i32 to vector<1x256xi32>
    %15 = arith.addi %4, %14 : vector<1x256xi32>
    %16 = arith.select %13, %15, %4 : vector<1x256xi1>, vector<1x256xi32>
    %c32_i32 = arith.constant 32 : i32
    %17 = vector.broadcast %c32_i32 : i32 to vector<1x256xi32>
    %18 = arith.cmpi slt, %16, %17 : vector<1x256xi32>
    %c128_i32 = arith.constant 128 : i32
    %19 = vector.broadcast %c128_i32 : i32 to vector<1x256xi32>
    %20 = arith.cmpi sge, %0, %19 : vector<1x256xi32>
    %c192_i32 = arith.constant 192 : i32
    %21 = vector.broadcast %c192_i32 : i32 to vector<1x256xi32>
    %22 = arith.cmpi slt, %0, %21 : vector<1x256xi32>
    %23 = arith.andi %20, %22 : vector<1x256xi1>
    %24 = tpu.iota {dimensions = array<i32: 1>} : vector<1x64xi32>
    %c32_i32_3 = arith.constant 32 : i32
    %25 = vector.broadcast %c32_i32_3 : i32 to vector<1x64xi32>
    %26 = arith.cmpi slt, %24, %25 : vector<1x64xi32>
    %c0 = arith.constant 0 : index
    %c0_4 = arith.constant 0 : index
    %27 = vector.load %arg0[%c0, %c0_4] : memref<64x256xf32, #tpu.memory_space<vmem>>, vector<64x256xf32>
    %28 = vector.extract_strided_slice %27 {offsets = [0, 0], sizes = [8, 256], strides = [1, 1]} : vector<64x256xf32> to vector<8x256xf32>
    %29 = vector.extract_strided_slice %27 {offsets = [8, 0], sizes = [8, 256], strides = [1, 1]} : vector<64x256xf32> to vector<8x256xf32>
    %30 = vector.extract_strided_slice %27 {offsets = [16, 0], sizes = [8, 256], strides = [1, 1]} : vector<64x256xf32> to vector<8x256xf32>
    %31 = vector.extract_strided_slice %27 {offsets = [24, 0], sizes = [8, 256], strides = [1, 1]} : vector<64x256xf32> to vector<8x256xf32>
    %32 = vector.extract_strided_slice %27 {offsets = [32, 0], sizes = [8, 256], strides = [1, 1]} : vector<64x256xf32> to vector<8x256xf32>
    %33 = vector.extract_strided_slice %27 {offsets = [40, 0], sizes = [8, 256], strides = [1, 1]} : vector<64x256xf32> to vector<8x256xf32>
    %34 = vector.extract_strided_slice %27 {offsets = [48, 0], sizes = [8, 256], strides = [1, 1]} : vector<64x256xf32> to vector<8x256xf32>
    %35 = vector.extract_strided_slice %27 {offsets = [56, 0], sizes = [8, 256], strides = [1, 1]} : vector<64x256xf32> to vector<8x256xf32>
    %36 = vector.shape_cast %18 : vector<1x256xi1> to vector<1x256xi1>
    %37 = vector.broadcast %36 : vector<1x256xi1> to vector<8x256xi1>
    %38 = arith.select %37, %28, %35 : vector<8x256xi1>, vector<8x256xf32>
    %39 = vector.shape_cast %18 : vector<1x256xi1> to vector<1x256xi1>
    %40 = vector.broadcast %39 : vector<1x256xi1> to vector<8x256xi1>
    %41 = arith.select %40, %29, %34 : vector<8x256xi1>, vector<8x256xf32>
    %42 = vector.shape_cast %18 : vector<1x256xi1> to vector<1x256xi1>
    %43 = vector.broadcast %42 : vector<1x256xi1> to vector<8x256xi1>
    %44 = arith.select %43, %30, %33 : vector<8x256xi1>, vector<8x256xf32>
    %45 = vector.shape_cast %18 : vector<1x256xi1> to vector<1x256xi1>
    %46 = vector.broadcast %45 : vector<1x256xi1> to vector<8x256xi1>
    %47 = arith.select %46, %31, %32 : vector<8x256xi1>, vector<8x256xf32>
    %48 = vector.shape_cast %18 : vector<1x256xi1> to vector<1x256xi1>
    %49 = vector.broadcast %48 : vector<1x256xi1> to vector<8x256xi1>
    %50 = arith.select %49, %32, %31 : vector<8x256xi1>, vector<8x256xf32>
    %51 = vector.shape_cast %18 : vector<1x256xi1> to vector<1x256xi1>
    %52 = vector.broadcast %51 : vector<1x256xi1> to vector<8x256xi1>
    %53 = arith.select %52, %33, %30 : vector<8x256xi1>, vector<8x256xf32>
    %54 = vector.shape_cast %18 : vector<1x256xi1> to vector<1x256xi1>
    %55 = vector.broadcast %54 : vector<1x256xi1> to vector<8x256xi1>
    %56 = arith.select %55, %34, %29 : vector<8x256xi1>, vector<8x256xf32>
    %57 = vector.shape_cast %18 : vector<1x256xi1> to vector<1x256xi1>
    %58 = vector.broadcast %57 : vector<1x256xi1> to vector<8x256xi1>
    %59 = arith.select %58, %35, %28 : vector<8x256xi1>, vector<8x256xf32>
    %c0_5 = arith.constant 0 : index
    %c0_6 = arith.constant 0 : index
    %60 = vector.load %arg1[%c0_5, %c0_6] : memref<64x256xbf16, #tpu.memory_space<vmem>>, vector<64x256xbf16>
    %cst = arith.constant 0.000000e+00 : f32
    %61 = vector.broadcast %cst : f32 to vector<8x64xf32>
    %62 = math.tanh %38 : vector<8x256xf32>
    %cst_7 = arith.constant 5.000000e-01 : f32
    %63 = vector.broadcast %cst_7 : f32 to vector<8x256xf32>
    %64 = arith.mulf %63, %62 : vector<8x256xf32>
    %cst_8 = arith.constant 5.000000e-01 : f32
    %65 = vector.broadcast %cst_8 : f32 to vector<8x256xf32>
    %66 = arith.addf %64, %65 : vector<8x256xf32>
    %67 = vector.shape_cast %23 : vector<1x256xi1> to vector<1x256xi1>
    %68 = vector.broadcast %67 : vector<1x256xi1> to vector<8x256xi1>
    %69 = arith.select %68, %62, %66 : vector<8x256xi1>, vector<8x256xf32>
    %70 = vector.extract_strided_slice %69 {offsets = [0, 0], sizes = [8, 64], strides = [1, 1]} : vector<8x256xf32> to vector<8x64xf32>
    %71 = vector.extract_strided_slice %69 {offsets = [0, 64], sizes = [8, 64], strides = [1, 1]} : vector<8x256xf32> to vector<8x64xf32>
    %72 = vector.extract_strided_slice %69 {offsets = [0, 128], sizes = [8, 64], strides = [1, 1]} : vector<8x256xf32> to vector<8x64xf32>
    %73 = vector.extract_strided_slice %69 {offsets = [0, 192], sizes = [8, 64], strides = [1, 1]} : vector<8x256xf32> to vector<8x64xf32>
    %74 = arith.mulf %71, %61 : vector<8x64xf32>
    %75 = arith.mulf %70, %72 : vector<8x64xf32>
    %76 = arith.addf %74, %75 : vector<8x64xf32>
    %77 = math.tanh %76 : vector<8x64xf32>
    %78 = arith.mulf %73, %77 : vector<8x64xf32>
    %79 = arith.truncf %78 : vector<8x64xf32> to vector<8x64xbf16>
    %cst_9 = arith.constant dense<0.000000e+00> : vector<8x256xf32>
    %80 = tpu.matmul %79, %60, %cst_9 {dimension_numbers = #tpu.dot_dimension_numbers<[1], [0], [0], [1], [0, 0, 1, 1], [], []>} : vector<8x64xbf16>, vector<64x256xbf16>, vector<8x256xf32> -> vector<8x256xf32>
    %81 = arith.addf %41, %80 : vector<8x256xf32>
    %82 = math.tanh %81 : vector<8x256xf32>
    %cst_10 = arith.constant 5.000000e-01 : f32
    %83 = vector.broadcast %cst_10 : f32 to vector<8x256xf32>
    %84 = arith.mulf %83, %82 : vector<8x256xf32>
    %cst_11 = arith.constant 5.000000e-01 : f32
    %85 = vector.broadcast %cst_11 : f32 to vector<8x256xf32>
    %86 = arith.addf %84, %85 : vector<8x256xf32>
    %87 = vector.shape_cast %23 : vector<1x256xi1> to vector<1x256xi1>
    %88 = vector.broadcast %87 : vector<1x256xi1> to vector<8x256xi1>
    %89 = arith.select %88, %82, %86 : vector<8x256xi1>, vector<8x256xf32>
    %90 = vector.extract_strided_slice %89 {offsets = [0, 0], sizes = [8, 64], strides = [1, 1]} : vector<8x256xf32> to vector<8x64xf32>
    %91 = vector.extract_strided_slice %89 {offsets = [0, 64], sizes = [8, 64], strides = [1, 1]} : vector<8x256xf32> to vector<8x64xf32>
    %92 = vector.extract_strided_slice %89 {offsets = [0, 128], sizes = [8, 64], strides = [1, 1]} : vector<8x256xf32> to vector<8x64xf32>
    %93 = vector.extract_strided_slice %89 {offsets = [0, 192], sizes = [8, 64], strides = [1, 1]} : vector<8x256xf32> to vector<8x64xf32>
    %94 = arith.mulf %91, %76 : vector<8x64xf32>
    %95 = arith.mulf %90, %92 : vector<8x64xf32>
    %96 = arith.addf %94, %95 : vector<8x64xf32>
    %97 = math.tanh %96 : vector<8x64xf32>
    %98 = arith.mulf %93, %97 : vector<8x64xf32>
    %99 = arith.truncf %98 : vector<8x64xf32> to vector<8x64xbf16>
    %cst_12 = arith.constant dense<0.000000e+00> : vector<8x256xf32>
    %100 = tpu.matmul %99, %60, %cst_12 {dimension_numbers = #tpu.dot_dimension_numbers<[1], [0], [0], [1], [0, 0, 1, 1], [], []>} : vector<8x64xbf16>, vector<64x256xbf16>, vector<8x256xf32> -> vector<8x256xf32>
    %101 = arith.addf %44, %100 : vector<8x256xf32>
    %102 = math.tanh %101 : vector<8x256xf32>
    %cst_13 = arith.constant 5.000000e-01 : f32
    %103 = vector.broadcast %cst_13 : f32 to vector<8x256xf32>
    %104 = arith.mulf %103, %102 : vector<8x256xf32>
    %cst_14 = arith.constant 5.000000e-01 : f32
    %105 = vector.broadcast %cst_14 : f32 to vector<8x256xf32>
    %106 = arith.addf %104, %105 : vector<8x256xf32>
    %107 = vector.shape_cast %23 : vector<1x256xi1> to vector<1x256xi1>
    %108 = vector.broadcast %107 : vector<1x256xi1> to vector<8x256xi1>
    %109 = arith.select %108, %102, %106 : vector<8x256xi1>, vector<8x256xf32>
    %110 = vector.extract_strided_slice %109 {offsets = [0, 0], sizes = [8, 64], strides = [1, 1]} : vector<8x256xf32> to vector<8x64xf32>
    %111 = vector.extract_strided_slice %109 {offsets = [0, 64], sizes = [8, 64], strides = [1, 1]} : vector<8x256xf32> to vector<8x64xf32>
    %112 = vector.extract_strided_slice %109 {offsets = [0, 128], sizes = [8, 64], strides = [1, 1]} : vector<8x256xf32> to vector<8x64xf32>
    %113 = vector.extract_strided_slice %109 {offsets = [0, 192], sizes = [8, 64], strides = [1, 1]} : vector<8x256xf32> to vector<8x64xf32>
    %114 = arith.mulf %111, %96 : vector<8x64xf32>
    %115 = arith.mulf %110, %112 : vector<8x64xf32>
    %116 = arith.addf %114, %115 : vector<8x64xf32>
    %117 = math.tanh %116 : vector<8x64xf32>
    %118 = arith.mulf %113, %117 : vector<8x64xf32>
    %119 = arith.truncf %118 : vector<8x64xf32> to vector<8x64xbf16>
    %cst_15 = arith.constant dense<0.000000e+00> : vector<8x256xf32>
    %120 = tpu.matmul %119, %60, %cst_15 {dimension_numbers = #tpu.dot_dimension_numbers<[1], [0], [0], [1], [0, 0, 1, 1], [], []>} : vector<8x64xbf16>, vector<64x256xbf16>, vector<8x256xf32> -> vector<8x256xf32>
    %121 = arith.addf %47, %120 : vector<8x256xf32>
    %122 = math.tanh %121 : vector<8x256xf32>
    %cst_16 = arith.constant 5.000000e-01 : f32
    %123 = vector.broadcast %cst_16 : f32 to vector<8x256xf32>
    %124 = arith.mulf %123, %122 : vector<8x256xf32>
    %cst_17 = arith.constant 5.000000e-01 : f32
    %125 = vector.broadcast %cst_17 : f32 to vector<8x256xf32>
    %126 = arith.addf %124, %125 : vector<8x256xf32>
    %127 = vector.shape_cast %23 : vector<1x256xi1> to vector<1x256xi1>
    %128 = vector.broadcast %127 : vector<1x256xi1> to vector<8x256xi1>
    %129 = arith.select %128, %122, %126 : vector<8x256xi1>, vector<8x256xf32>
    %130 = vector.extract_strided_slice %129 {offsets = [0, 0], sizes = [8, 64], strides = [1, 1]} : vector<8x256xf32> to vector<8x64xf32>
    %131 = vector.extract_strided_slice %129 {offsets = [0, 64], sizes = [8, 64], strides = [1, 1]} : vector<8x256xf32> to vector<8x64xf32>
    %132 = vector.extract_strided_slice %129 {offsets = [0, 128], sizes = [8, 64], strides = [1, 1]} : vector<8x256xf32> to vector<8x64xf32>
    %133 = vector.extract_strided_slice %129 {offsets = [0, 192], sizes = [8, 64], strides = [1, 1]} : vector<8x256xf32> to vector<8x64xf32>
    %134 = arith.mulf %131, %116 : vector<8x64xf32>
    %135 = arith.mulf %130, %132 : vector<8x64xf32>
    %136 = arith.addf %134, %135 : vector<8x64xf32>
    %137 = math.tanh %136 : vector<8x64xf32>
    %138 = arith.mulf %133, %137 : vector<8x64xf32>
    %139 = arith.truncf %138 : vector<8x64xf32> to vector<8x64xbf16>
    %cst_18 = arith.constant dense<0.000000e+00> : vector<8x256xf32>
    %140 = tpu.matmul %139, %60, %cst_18 {dimension_numbers = #tpu.dot_dimension_numbers<[1], [0], [0], [1], [0, 0, 1, 1], [], []>} : vector<8x64xbf16>, vector<64x256xbf16>, vector<8x256xf32> -> vector<8x256xf32>
    %141 = arith.addf %50, %140 : vector<8x256xf32>
    %142 = math.tanh %141 : vector<8x256xf32>
    %cst_19 = arith.constant 5.000000e-01 : f32
    %143 = vector.broadcast %cst_19 : f32 to vector<8x256xf32>
    %144 = arith.mulf %143, %142 : vector<8x256xf32>
    %cst_20 = arith.constant 5.000000e-01 : f32
    %145 = vector.broadcast %cst_20 : f32 to vector<8x256xf32>
    %146 = arith.addf %144, %145 : vector<8x256xf32>
    %147 = vector.shape_cast %23 : vector<1x256xi1> to vector<1x256xi1>
    %148 = vector.broadcast %147 : vector<1x256xi1> to vector<8x256xi1>
    %149 = arith.select %148, %142, %146 : vector<8x256xi1>, vector<8x256xf32>
    %150 = vector.extract_strided_slice %149 {offsets = [0, 0], sizes = [8, 64], strides = [1, 1]} : vector<8x256xf32> to vector<8x64xf32>
    %151 = vector.extract_strided_slice %149 {offsets = [0, 64], sizes = [8, 64], strides = [1, 1]} : vector<8x256xf32> to vector<8x64xf32>
    %152 = vector.extract_strided_slice %149 {offsets = [0, 128], sizes = [8, 64], strides = [1, 1]} : vector<8x256xf32> to vector<8x64xf32>
    %153 = vector.extract_strided_slice %149 {offsets = [0, 192], sizes = [8, 64], strides = [1, 1]} : vector<8x256xf32> to vector<8x64xf32>
    %154 = arith.mulf %151, %136 : vector<8x64xf32>
    %155 = arith.mulf %150, %152 : vector<8x64xf32>
    %156 = arith.addf %154, %155 : vector<8x64xf32>
    %157 = math.tanh %156 : vector<8x64xf32>
    %158 = arith.mulf %153, %157 : vector<8x64xf32>
    %159 = arith.truncf %158 : vector<8x64xf32> to vector<8x64xbf16>
    %cst_21 = arith.constant dense<0.000000e+00> : vector<8x256xf32>
    %160 = tpu.matmul %159, %60, %cst_21 {dimension_numbers = #tpu.dot_dimension_numbers<[1], [0], [0], [1], [0, 0, 1, 1], [], []>} : vector<8x64xbf16>, vector<64x256xbf16>, vector<8x256xf32> -> vector<8x256xf32>
    %161 = arith.addf %53, %160 : vector<8x256xf32>
    %162 = math.tanh %161 : vector<8x256xf32>
    %cst_22 = arith.constant 5.000000e-01 : f32
    %163 = vector.broadcast %cst_22 : f32 to vector<8x256xf32>
    %164 = arith.mulf %163, %162 : vector<8x256xf32>
    %cst_23 = arith.constant 5.000000e-01 : f32
    %165 = vector.broadcast %cst_23 : f32 to vector<8x256xf32>
    %166 = arith.addf %164, %165 : vector<8x256xf32>
    %167 = vector.shape_cast %23 : vector<1x256xi1> to vector<1x256xi1>
    %168 = vector.broadcast %167 : vector<1x256xi1> to vector<8x256xi1>
    %169 = arith.select %168, %162, %166 : vector<8x256xi1>, vector<8x256xf32>
    %170 = vector.extract_strided_slice %169 {offsets = [0, 0], sizes = [8, 64], strides = [1, 1]} : vector<8x256xf32> to vector<8x64xf32>
    %171 = vector.extract_strided_slice %169 {offsets = [0, 64], sizes = [8, 64], strides = [1, 1]} : vector<8x256xf32> to vector<8x64xf32>
    %172 = vector.extract_strided_slice %169 {offsets = [0, 128], sizes = [8, 64], strides = [1, 1]} : vector<8x256xf32> to vector<8x64xf32>
    %173 = vector.extract_strided_slice %169 {offsets = [0, 192], sizes = [8, 64], strides = [1, 1]} : vector<8x256xf32> to vector<8x64xf32>
    %174 = arith.mulf %171, %156 : vector<8x64xf32>
    %175 = arith.mulf %170, %172 : vector<8x64xf32>
    %176 = arith.addf %174, %175 : vector<8x64xf32>
    %177 = math.tanh %176 : vector<8x64xf32>
    %178 = arith.mulf %173, %177 : vector<8x64xf32>
    %179 = arith.truncf %178 : vector<8x64xf32> to vector<8x64xbf16>
    %cst_24 = arith.constant dense<0.000000e+00> : vector<8x256xf32>
    %180 = tpu.matmul %179, %60, %cst_24 {dimension_numbers = #tpu.dot_dimension_numbers<[1], [0], [0], [1], [0, 0, 1, 1], [], []>} : vector<8x64xbf16>, vector<64x256xbf16>, vector<8x256xf32> -> vector<8x256xf32>
    %181 = arith.addf %56, %180 : vector<8x256xf32>
    %182 = math.tanh %181 : vector<8x256xf32>
    %cst_25 = arith.constant 5.000000e-01 : f32
    %183 = vector.broadcast %cst_25 : f32 to vector<8x256xf32>
    %184 = arith.mulf %183, %182 : vector<8x256xf32>
    %cst_26 = arith.constant 5.000000e-01 : f32
    %185 = vector.broadcast %cst_26 : f32 to vector<8x256xf32>
    %186 = arith.addf %184, %185 : vector<8x256xf32>
    %187 = vector.shape_cast %23 : vector<1x256xi1> to vector<1x256xi1>
    %188 = vector.broadcast %187 : vector<1x256xi1> to vector<8x256xi1>
    %189 = arith.select %188, %182, %186 : vector<8x256xi1>, vector<8x256xf32>
    %190 = vector.extract_strided_slice %189 {offsets = [0, 0], sizes = [8, 64], strides = [1, 1]} : vector<8x256xf32> to vector<8x64xf32>
    %191 = vector.extract_strided_slice %189 {offsets = [0, 64], sizes = [8, 64], strides = [1, 1]} : vector<8x256xf32> to vector<8x64xf32>
    %192 = vector.extract_strided_slice %189 {offsets = [0, 128], sizes = [8, 64], strides = [1, 1]} : vector<8x256xf32> to vector<8x64xf32>
    %193 = vector.extract_strided_slice %189 {offsets = [0, 192], sizes = [8, 64], strides = [1, 1]} : vector<8x256xf32> to vector<8x64xf32>
    %194 = arith.mulf %191, %176 : vector<8x64xf32>
    %195 = arith.mulf %190, %192 : vector<8x64xf32>
    %196 = arith.addf %194, %195 : vector<8x64xf32>
    %197 = math.tanh %196 : vector<8x64xf32>
    %198 = arith.mulf %193, %197 : vector<8x64xf32>
    %199 = arith.truncf %198 : vector<8x64xf32> to vector<8x64xbf16>
    %cst_27 = arith.constant dense<0.000000e+00> : vector<8x256xf32>
    %200 = tpu.matmul %199, %60, %cst_27 {dimension_numbers = #tpu.dot_dimension_numbers<[1], [0], [0], [1], [0, 0, 1, 1], [], []>} : vector<8x64xbf16>, vector<64x256xbf16>, vector<8x256xf32> -> vector<8x256xf32>
    %201 = arith.addf %59, %200 : vector<8x256xf32>
    %202 = math.tanh %201 : vector<8x256xf32>
    %cst_28 = arith.constant 5.000000e-01 : f32
    %203 = vector.broadcast %cst_28 : f32 to vector<8x256xf32>
    %204 = arith.mulf %203, %202 : vector<8x256xf32>
    %cst_29 = arith.constant 5.000000e-01 : f32
    %205 = vector.broadcast %cst_29 : f32 to vector<8x256xf32>
    %206 = arith.addf %204, %205 : vector<8x256xf32>
    %207 = vector.shape_cast %23 : vector<1x256xi1> to vector<1x256xi1>
    %208 = vector.broadcast %207 : vector<1x256xi1> to vector<8x256xi1>
    %209 = arith.select %208, %202, %206 : vector<8x256xi1>, vector<8x256xf32>
    %210 = vector.extract_strided_slice %209 {offsets = [0, 0], sizes = [8, 64], strides = [1, 1]} : vector<8x256xf32> to vector<8x64xf32>
    %211 = vector.extract_strided_slice %209 {offsets = [0, 64], sizes = [8, 64], strides = [1, 1]} : vector<8x256xf32> to vector<8x64xf32>
    %212 = vector.extract_strided_slice %209 {offsets = [0, 128], sizes = [8, 64], strides = [1, 1]} : vector<8x256xf32> to vector<8x64xf32>
    %213 = vector.extract_strided_slice %209 {offsets = [0, 192], sizes = [8, 64], strides = [1, 1]} : vector<8x256xf32> to vector<8x64xf32>
    %214 = arith.mulf %211, %196 : vector<8x64xf32>
    %215 = arith.mulf %210, %212 : vector<8x64xf32>
    %216 = arith.addf %214, %215 : vector<8x64xf32>
    %217 = math.tanh %216 : vector<8x64xf32>
    %218 = arith.mulf %213, %217 : vector<8x64xf32>
    %219 = vector.shape_cast %26 : vector<1x64xi1> to vector<1x64xi1>
    %220 = vector.broadcast %219 : vector<1x64xi1> to vector<8x64xi1>
    %221 = arith.select %220, %78, %218 : vector<8x64xi1>, vector<8x64xf32>
    %222 = vector.shape_cast %26 : vector<1x64xi1> to vector<1x64xi1>
    %223 = vector.broadcast %222 : vector<1x64xi1> to vector<8x64xi1>
    %224 = arith.select %223, %98, %198 : vector<8x64xi1>, vector<8x64xf32>
    %225 = vector.shape_cast %26 : vector<1x64xi1> to vector<1x64xi1>
    %226 = vector.broadcast %225 : vector<1x64xi1> to vector<8x64xi1>
    %227 = arith.select %226, %118, %178 : vector<8x64xi1>, vector<8x64xf32>
    %228 = vector.shape_cast %26 : vector<1x64xi1> to vector<1x64xi1>
    %229 = vector.broadcast %228 : vector<1x64xi1> to vector<8x64xi1>
    %230 = arith.select %229, %138, %158 : vector<8x64xi1>, vector<8x64xf32>
    %231 = vector.shape_cast %26 : vector<1x64xi1> to vector<1x64xi1>
    %232 = vector.broadcast %231 : vector<1x64xi1> to vector<8x64xi1>
    %233 = arith.select %232, %158, %138 : vector<8x64xi1>, vector<8x64xf32>
    %234 = vector.shape_cast %26 : vector<1x64xi1> to vector<1x64xi1>
    %235 = vector.broadcast %234 : vector<1x64xi1> to vector<8x64xi1>
    %236 = arith.select %235, %178, %118 : vector<8x64xi1>, vector<8x64xf32>
    %237 = vector.shape_cast %26 : vector<1x64xi1> to vector<1x64xi1>
    %238 = vector.broadcast %237 : vector<1x64xi1> to vector<8x64xi1>
    %239 = arith.select %238, %198, %98 : vector<8x64xi1>, vector<8x64xf32>
    %240 = vector.shape_cast %26 : vector<1x64xi1> to vector<1x64xi1>
    %241 = vector.broadcast %240 : vector<1x64xi1> to vector<8x64xi1>
    %242 = arith.select %241, %218, %78 : vector<8x64xi1>, vector<8x64xf32>
    %243 = tpu.concatenate %221, %224, %227, %230, %233, %236, %239, %242 in 0 : vector<8x64xf32>, vector<8x64xf32>, vector<8x64xf32>, vector<8x64xf32>, vector<8x64xf32>, vector<8x64xf32>, vector<8x64xf32>, vector<8x64xf32> -> vector<64x64xf32>
    %244 = arith.truncf %243 : vector<64x64xf32> to vector<64x64xbf16>
    %c0_30 = arith.constant 0 : index
    %c0_31 = arith.constant 0 : index
    %245 = vector.load %arg2[%c0_30, %c0_31] : memref<64x256xbf16, #tpu.memory_space<vmem>>, vector<64x256xbf16>
    %cst_32 = arith.constant dense<0.000000e+00> : vector<64x256xf32>
    %246 = tpu.matmul %244, %245, %cst_32 {dimension_numbers = #tpu.dot_dimension_numbers<[1], [0], [0], [1], [0, 0, 1, 1], [], []>} : vector<64x64xbf16>, vector<64x256xbf16>, vector<64x256xf32> -> vector<64x256xf32>
    %c0_33 = arith.constant 0 : index
    %c0_34 = arith.constant 0 : index
    %247 = vector.load %arg4[%c0_33, %c0_34] : memref<1x256xf32, #tpu.memory_space<vmem>>, vector<1x256xf32>
    %248 = vector.broadcast %247 : vector<1x256xf32> to vector<64x256xf32>
    %249 = arith.addf %246, %248 : vector<64x256xf32>
    %250 = vector.extract_strided_slice %249 {offsets = [0, 0], sizes = [8, 256], strides = [1, 1]} : vector<64x256xf32> to vector<8x256xf32>
    %251 = vector.extract_strided_slice %249 {offsets = [8, 0], sizes = [8, 256], strides = [1, 1]} : vector<64x256xf32> to vector<8x256xf32>
    %252 = vector.extract_strided_slice %249 {offsets = [16, 0], sizes = [8, 256], strides = [1, 1]} : vector<64x256xf32> to vector<8x256xf32>
    %253 = vector.extract_strided_slice %249 {offsets = [24, 0], sizes = [8, 256], strides = [1, 1]} : vector<64x256xf32> to vector<8x256xf32>
    %254 = vector.extract_strided_slice %249 {offsets = [32, 0], sizes = [8, 256], strides = [1, 1]} : vector<64x256xf32> to vector<8x256xf32>
    %255 = vector.extract_strided_slice %249 {offsets = [40, 0], sizes = [8, 256], strides = [1, 1]} : vector<64x256xf32> to vector<8x256xf32>
    %256 = vector.extract_strided_slice %249 {offsets = [48, 0], sizes = [8, 256], strides = [1, 1]} : vector<64x256xf32> to vector<8x256xf32>
    %257 = vector.extract_strided_slice %249 {offsets = [56, 0], sizes = [8, 256], strides = [1, 1]} : vector<64x256xf32> to vector<8x256xf32>
    %258 = vector.shape_cast %18 : vector<1x256xi1> to vector<1x256xi1>
    %259 = vector.broadcast %258 : vector<1x256xi1> to vector<8x256xi1>
    %260 = arith.select %259, %250, %257 : vector<8x256xi1>, vector<8x256xf32>
    %261 = vector.shape_cast %18 : vector<1x256xi1> to vector<1x256xi1>
    %262 = vector.broadcast %261 : vector<1x256xi1> to vector<8x256xi1>
    %263 = arith.select %262, %251, %256 : vector<8x256xi1>, vector<8x256xf32>
    %264 = vector.shape_cast %18 : vector<1x256xi1> to vector<1x256xi1>
    %265 = vector.broadcast %264 : vector<1x256xi1> to vector<8x256xi1>
    %266 = arith.select %265, %252, %255 : vector<8x256xi1>, vector<8x256xf32>
    %267 = vector.shape_cast %18 : vector<1x256xi1> to vector<1x256xi1>
    %268 = vector.broadcast %267 : vector<1x256xi1> to vector<8x256xi1>
    %269 = arith.select %268, %253, %254 : vector<8x256xi1>, vector<8x256xf32>
    %270 = vector.shape_cast %18 : vector<1x256xi1> to vector<1x256xi1>
    %271 = vector.broadcast %270 : vector<1x256xi1> to vector<8x256xi1>
    %272 = arith.select %271, %254, %253 : vector<8x256xi1>, vector<8x256xf32>
    %273 = vector.shape_cast %18 : vector<1x256xi1> to vector<1x256xi1>
    %274 = vector.broadcast %273 : vector<1x256xi1> to vector<8x256xi1>
    %275 = arith.select %274, %255, %252 : vector<8x256xi1>, vector<8x256xf32>
    %276 = vector.shape_cast %18 : vector<1x256xi1> to vector<1x256xi1>
    %277 = vector.broadcast %276 : vector<1x256xi1> to vector<8x256xi1>
    %278 = arith.select %277, %256, %251 : vector<8x256xi1>, vector<8x256xf32>
    %279 = vector.shape_cast %18 : vector<1x256xi1> to vector<1x256xi1>
    %280 = vector.broadcast %279 : vector<1x256xi1> to vector<8x256xi1>
    %281 = arith.select %280, %257, %250 : vector<8x256xi1>, vector<8x256xf32>
    %c0_35 = arith.constant 0 : index
    %c0_36 = arith.constant 0 : index
    %282 = vector.load %arg3[%c0_35, %c0_36] : memref<64x256xbf16, #tpu.memory_space<vmem>>, vector<64x256xbf16>
    %cst_37 = arith.constant 0.000000e+00 : f32
    %283 = vector.broadcast %cst_37 : f32 to vector<8x64xf32>
    %284 = math.tanh %260 : vector<8x256xf32>
    %cst_38 = arith.constant 5.000000e-01 : f32
    %285 = vector.broadcast %cst_38 : f32 to vector<8x256xf32>
    %286 = arith.mulf %285, %284 : vector<8x256xf32>
    %cst_39 = arith.constant 5.000000e-01 : f32
    %287 = vector.broadcast %cst_39 : f32 to vector<8x256xf32>
    %288 = arith.addf %286, %287 : vector<8x256xf32>
    %289 = vector.shape_cast %23 : vector<1x256xi1> to vector<1x256xi1>
    %290 = vector.broadcast %289 : vector<1x256xi1> to vector<8x256xi1>
    %291 = arith.select %290, %284, %288 : vector<8x256xi1>, vector<8x256xf32>
    %292 = vector.extract_strided_slice %291 {offsets = [0, 0], sizes = [8, 64], strides = [1, 1]} : vector<8x256xf32> to vector<8x64xf32>
    %293 = vector.extract_strided_slice %291 {offsets = [0, 64], sizes = [8, 64], strides = [1, 1]} : vector<8x256xf32> to vector<8x64xf32>
    %294 = vector.extract_strided_slice %291 {offsets = [0, 128], sizes = [8, 64], strides = [1, 1]} : vector<8x256xf32> to vector<8x64xf32>
    %295 = vector.extract_strided_slice %291 {offsets = [0, 192], sizes = [8, 64], strides = [1, 1]} : vector<8x256xf32> to vector<8x64xf32>
    %296 = arith.mulf %293, %283 : vector<8x64xf32>
    %297 = arith.mulf %292, %294 : vector<8x64xf32>
    %298 = arith.addf %296, %297 : vector<8x64xf32>
    %299 = math.tanh %298 : vector<8x64xf32>
    %300 = arith.mulf %295, %299 : vector<8x64xf32>
    %301 = arith.truncf %300 : vector<8x64xf32> to vector<8x64xbf16>
    %cst_40 = arith.constant dense<0.000000e+00> : vector<8x256xf32>
    %302 = tpu.matmul %301, %282, %cst_40 {dimension_numbers = #tpu.dot_dimension_numbers<[1], [0], [0], [1], [0, 0, 1, 1], [], []>} : vector<8x64xbf16>, vector<64x256xbf16>, vector<8x256xf32> -> vector<8x256xf32>
    %303 = arith.addf %263, %302 : vector<8x256xf32>
    %304 = math.tanh %303 : vector<8x256xf32>
    %cst_41 = arith.constant 5.000000e-01 : f32
    %305 = vector.broadcast %cst_41 : f32 to vector<8x256xf32>
    %306 = arith.mulf %305, %304 : vector<8x256xf32>
    %cst_42 = arith.constant 5.000000e-01 : f32
    %307 = vector.broadcast %cst_42 : f32 to vector<8x256xf32>
    %308 = arith.addf %306, %307 : vector<8x256xf32>
    %309 = vector.shape_cast %23 : vector<1x256xi1> to vector<1x256xi1>
    %310 = vector.broadcast %309 : vector<1x256xi1> to vector<8x256xi1>
    %311 = arith.select %310, %304, %308 : vector<8x256xi1>, vector<8x256xf32>
    %312 = vector.extract_strided_slice %311 {offsets = [0, 0], sizes = [8, 64], strides = [1, 1]} : vector<8x256xf32> to vector<8x64xf32>
    %313 = vector.extract_strided_slice %311 {offsets = [0, 64], sizes = [8, 64], strides = [1, 1]} : vector<8x256xf32> to vector<8x64xf32>
    %314 = vector.extract_strided_slice %311 {offsets = [0, 128], sizes = [8, 64], strides = [1, 1]} : vector<8x256xf32> to vector<8x64xf32>
    %315 = vector.extract_strided_slice %311 {offsets = [0, 192], sizes = [8, 64], strides = [1, 1]} : vector<8x256xf32> to vector<8x64xf32>
    %316 = arith.mulf %313, %298 : vector<8x64xf32>
    %317 = arith.mulf %312, %314 : vector<8x64xf32>
    %318 = arith.addf %316, %317 : vector<8x64xf32>
    %319 = math.tanh %318 : vector<8x64xf32>
    %320 = arith.mulf %315, %319 : vector<8x64xf32>
    %321 = arith.truncf %320 : vector<8x64xf32> to vector<8x64xbf16>
    %cst_43 = arith.constant dense<0.000000e+00> : vector<8x256xf32>
    %322 = tpu.matmul %321, %282, %cst_43 {dimension_numbers = #tpu.dot_dimension_numbers<[1], [0], [0], [1], [0, 0, 1, 1], [], []>} : vector<8x64xbf16>, vector<64x256xbf16>, vector<8x256xf32> -> vector<8x256xf32>
    %323 = arith.addf %266, %322 : vector<8x256xf32>
    %324 = math.tanh %323 : vector<8x256xf32>
    %cst_44 = arith.constant 5.000000e-01 : f32
    %325 = vector.broadcast %cst_44 : f32 to vector<8x256xf32>
    %326 = arith.mulf %325, %324 : vector<8x256xf32>
    %cst_45 = arith.constant 5.000000e-01 : f32
    %327 = vector.broadcast %cst_45 : f32 to vector<8x256xf32>
    %328 = arith.addf %326, %327 : vector<8x256xf32>
    %329 = vector.shape_cast %23 : vector<1x256xi1> to vector<1x256xi1>
    %330 = vector.broadcast %329 : vector<1x256xi1> to vector<8x256xi1>
    %331 = arith.select %330, %324, %328 : vector<8x256xi1>, vector<8x256xf32>
    %332 = vector.extract_strided_slice %331 {offsets = [0, 0], sizes = [8, 64], strides = [1, 1]} : vector<8x256xf32> to vector<8x64xf32>
    %333 = vector.extract_strided_slice %331 {offsets = [0, 64], sizes = [8, 64], strides = [1, 1]} : vector<8x256xf32> to vector<8x64xf32>
    %334 = vector.extract_strided_slice %331 {offsets = [0, 128], sizes = [8, 64], strides = [1, 1]} : vector<8x256xf32> to vector<8x64xf32>
    %335 = vector.extract_strided_slice %331 {offsets = [0, 192], sizes = [8, 64], strides = [1, 1]} : vector<8x256xf32> to vector<8x64xf32>
    %336 = arith.mulf %333, %318 : vector<8x64xf32>
    %337 = arith.mulf %332, %334 : vector<8x64xf32>
    %338 = arith.addf %336, %337 : vector<8x64xf32>
    %339 = math.tanh %338 : vector<8x64xf32>
    %340 = arith.mulf %335, %339 : vector<8x64xf32>
    %341 = arith.truncf %340 : vector<8x64xf32> to vector<8x64xbf16>
    %cst_46 = arith.constant dense<0.000000e+00> : vector<8x256xf32>
    %342 = tpu.matmul %341, %282, %cst_46 {dimension_numbers = #tpu.dot_dimension_numbers<[1], [0], [0], [1], [0, 0, 1, 1], [], []>} : vector<8x64xbf16>, vector<64x256xbf16>, vector<8x256xf32> -> vector<8x256xf32>
    %343 = arith.addf %269, %342 : vector<8x256xf32>
    %344 = math.tanh %343 : vector<8x256xf32>
    %cst_47 = arith.constant 5.000000e-01 : f32
    %345 = vector.broadcast %cst_47 : f32 to vector<8x256xf32>
    %346 = arith.mulf %345, %344 : vector<8x256xf32>
    %cst_48 = arith.constant 5.000000e-01 : f32
    %347 = vector.broadcast %cst_48 : f32 to vector<8x256xf32>
    %348 = arith.addf %346, %347 : vector<8x256xf32>
    %349 = vector.shape_cast %23 : vector<1x256xi1> to vector<1x256xi1>
    %350 = vector.broadcast %349 : vector<1x256xi1> to vector<8x256xi1>
    %351 = arith.select %350, %344, %348 : vector<8x256xi1>, vector<8x256xf32>
    %352 = vector.extract_strided_slice %351 {offsets = [0, 0], sizes = [8, 64], strides = [1, 1]} : vector<8x256xf32> to vector<8x64xf32>
    %353 = vector.extract_strided_slice %351 {offsets = [0, 64], sizes = [8, 64], strides = [1, 1]} : vector<8x256xf32> to vector<8x64xf32>
    %354 = vector.extract_strided_slice %351 {offsets = [0, 128], sizes = [8, 64], strides = [1, 1]} : vector<8x256xf32> to vector<8x64xf32>
    %355 = vector.extract_strided_slice %351 {offsets = [0, 192], sizes = [8, 64], strides = [1, 1]} : vector<8x256xf32> to vector<8x64xf32>
    %356 = arith.mulf %353, %338 : vector<8x64xf32>
    %357 = arith.mulf %352, %354 : vector<8x64xf32>
    %358 = arith.addf %356, %357 : vector<8x64xf32>
    %359 = math.tanh %358 : vector<8x64xf32>
    %360 = arith.mulf %355, %359 : vector<8x64xf32>
    %361 = arith.truncf %360 : vector<8x64xf32> to vector<8x64xbf16>
    %cst_49 = arith.constant dense<0.000000e+00> : vector<8x256xf32>
    %362 = tpu.matmul %361, %282, %cst_49 {dimension_numbers = #tpu.dot_dimension_numbers<[1], [0], [0], [1], [0, 0, 1, 1], [], []>} : vector<8x64xbf16>, vector<64x256xbf16>, vector<8x256xf32> -> vector<8x256xf32>
    %363 = arith.addf %272, %362 : vector<8x256xf32>
    %364 = math.tanh %363 : vector<8x256xf32>
    %cst_50 = arith.constant 5.000000e-01 : f32
    %365 = vector.broadcast %cst_50 : f32 to vector<8x256xf32>
    %366 = arith.mulf %365, %364 : vector<8x256xf32>
    %cst_51 = arith.constant 5.000000e-01 : f32
    %367 = vector.broadcast %cst_51 : f32 to vector<8x256xf32>
    %368 = arith.addf %366, %367 : vector<8x256xf32>
    %369 = vector.shape_cast %23 : vector<1x256xi1> to vector<1x256xi1>
    %370 = vector.broadcast %369 : vector<1x256xi1> to vector<8x256xi1>
    %371 = arith.select %370, %364, %368 : vector<8x256xi1>, vector<8x256xf32>
    %372 = vector.extract_strided_slice %371 {offsets = [0, 0], sizes = [8, 64], strides = [1, 1]} : vector<8x256xf32> to vector<8x64xf32>
    %373 = vector.extract_strided_slice %371 {offsets = [0, 64], sizes = [8, 64], strides = [1, 1]} : vector<8x256xf32> to vector<8x64xf32>
    %374 = vector.extract_strided_slice %371 {offsets = [0, 128], sizes = [8, 64], strides = [1, 1]} : vector<8x256xf32> to vector<8x64xf32>
    %375 = vector.extract_strided_slice %371 {offsets = [0, 192], sizes = [8, 64], strides = [1, 1]} : vector<8x256xf32> to vector<8x64xf32>
    %376 = arith.mulf %373, %358 : vector<8x64xf32>
    %377 = arith.mulf %372, %374 : vector<8x64xf32>
    %378 = arith.addf %376, %377 : vector<8x64xf32>
    %379 = math.tanh %378 : vector<8x64xf32>
    %380 = arith.mulf %375, %379 : vector<8x64xf32>
    %381 = arith.truncf %380 : vector<8x64xf32> to vector<8x64xbf16>
    %cst_52 = arith.constant dense<0.000000e+00> : vector<8x256xf32>
    %382 = tpu.matmul %381, %282, %cst_52 {dimension_numbers = #tpu.dot_dimension_numbers<[1], [0], [0], [1], [0, 0, 1, 1], [], []>} : vector<8x64xbf16>, vector<64x256xbf16>, vector<8x256xf32> -> vector<8x256xf32>
    %383 = arith.addf %275, %382 : vector<8x256xf32>
    %384 = math.tanh %383 : vector<8x256xf32>
    %cst_53 = arith.constant 5.000000e-01 : f32
    %385 = vector.broadcast %cst_53 : f32 to vector<8x256xf32>
    %386 = arith.mulf %385, %384 : vector<8x256xf32>
    %cst_54 = arith.constant 5.000000e-01 : f32
    %387 = vector.broadcast %cst_54 : f32 to vector<8x256xf32>
    %388 = arith.addf %386, %387 : vector<8x256xf32>
    %389 = vector.shape_cast %23 : vector<1x256xi1> to vector<1x256xi1>
    %390 = vector.broadcast %389 : vector<1x256xi1> to vector<8x256xi1>
    %391 = arith.select %390, %384, %388 : vector<8x256xi1>, vector<8x256xf32>
    %392 = vector.extract_strided_slice %391 {offsets = [0, 0], sizes = [8, 64], strides = [1, 1]} : vector<8x256xf32> to vector<8x64xf32>
    %393 = vector.extract_strided_slice %391 {offsets = [0, 64], sizes = [8, 64], strides = [1, 1]} : vector<8x256xf32> to vector<8x64xf32>
    %394 = vector.extract_strided_slice %391 {offsets = [0, 128], sizes = [8, 64], strides = [1, 1]} : vector<8x256xf32> to vector<8x64xf32>
    %395 = vector.extract_strided_slice %391 {offsets = [0, 192], sizes = [8, 64], strides = [1, 1]} : vector<8x256xf32> to vector<8x64xf32>
    %396 = arith.mulf %393, %378 : vector<8x64xf32>
    %397 = arith.mulf %392, %394 : vector<8x64xf32>
    %398 = arith.addf %396, %397 : vector<8x64xf32>
    %399 = math.tanh %398 : vector<8x64xf32>
    %400 = arith.mulf %395, %399 : vector<8x64xf32>
    %401 = arith.truncf %400 : vector<8x64xf32> to vector<8x64xbf16>
    %cst_55 = arith.constant dense<0.000000e+00> : vector<8x256xf32>
    %402 = tpu.matmul %401, %282, %cst_55 {dimension_numbers = #tpu.dot_dimension_numbers<[1], [0], [0], [1], [0, 0, 1, 1], [], []>} : vector<8x64xbf16>, vector<64x256xbf16>, vector<8x256xf32> -> vector<8x256xf32>
    %403 = arith.addf %278, %402 : vector<8x256xf32>
    %404 = math.tanh %403 : vector<8x256xf32>
    %cst_56 = arith.constant 5.000000e-01 : f32
    %405 = vector.broadcast %cst_56 : f32 to vector<8x256xf32>
    %406 = arith.mulf %405, %404 : vector<8x256xf32>
    %cst_57 = arith.constant 5.000000e-01 : f32
    %407 = vector.broadcast %cst_57 : f32 to vector<8x256xf32>
    %408 = arith.addf %406, %407 : vector<8x256xf32>
    %409 = vector.shape_cast %23 : vector<1x256xi1> to vector<1x256xi1>
    %410 = vector.broadcast %409 : vector<1x256xi1> to vector<8x256xi1>
    %411 = arith.select %410, %404, %408 : vector<8x256xi1>, vector<8x256xf32>
    %412 = vector.extract_strided_slice %411 {offsets = [0, 0], sizes = [8, 64], strides = [1, 1]} : vector<8x256xf32> to vector<8x64xf32>
    %413 = vector.extract_strided_slice %411 {offsets = [0, 64], sizes = [8, 64], strides = [1, 1]} : vector<8x256xf32> to vector<8x64xf32>
    %414 = vector.extract_strided_slice %411 {offsets = [0, 128], sizes = [8, 64], strides = [1, 1]} : vector<8x256xf32> to vector<8x64xf32>
    %415 = vector.extract_strided_slice %411 {offsets = [0, 192], sizes = [8, 64], strides = [1, 1]} : vector<8x256xf32> to vector<8x64xf32>
    %416 = arith.mulf %413, %398 : vector<8x64xf32>
    %417 = arith.mulf %412, %414 : vector<8x64xf32>
    %418 = arith.addf %416, %417 : vector<8x64xf32>
    %419 = math.tanh %418 : vector<8x64xf32>
    %420 = arith.mulf %415, %419 : vector<8x64xf32>
    %421 = arith.truncf %420 : vector<8x64xf32> to vector<8x64xbf16>
    %cst_58 = arith.constant dense<0.000000e+00> : vector<8x256xf32>
    %422 = tpu.matmul %421, %282, %cst_58 {dimension_numbers = #tpu.dot_dimension_numbers<[1], [0], [0], [1], [0, 0, 1, 1], [], []>} : vector<8x64xbf16>, vector<64x256xbf16>, vector<8x256xf32> -> vector<8x256xf32>
    %423 = arith.addf %281, %422 : vector<8x256xf32>
    %424 = math.tanh %423 : vector<8x256xf32>
    %cst_59 = arith.constant 5.000000e-01 : f32
    %425 = vector.broadcast %cst_59 : f32 to vector<8x256xf32>
    %426 = arith.mulf %425, %424 : vector<8x256xf32>
    %cst_60 = arith.constant 5.000000e-01 : f32
    %427 = vector.broadcast %cst_60 : f32 to vector<8x256xf32>
    %428 = arith.addf %426, %427 : vector<8x256xf32>
    %429 = vector.shape_cast %23 : vector<1x256xi1> to vector<1x256xi1>
    %430 = vector.broadcast %429 : vector<1x256xi1> to vector<8x256xi1>
    %431 = arith.select %430, %424, %428 : vector<8x256xi1>, vector<8x256xf32>
    %432 = vector.extract_strided_slice %431 {offsets = [0, 0], sizes = [8, 64], strides = [1, 1]} : vector<8x256xf32> to vector<8x64xf32>
    %433 = vector.extract_strided_slice %431 {offsets = [0, 64], sizes = [8, 64], strides = [1, 1]} : vector<8x256xf32> to vector<8x64xf32>
    %434 = vector.extract_strided_slice %431 {offsets = [0, 128], sizes = [8, 64], strides = [1, 1]} : vector<8x256xf32> to vector<8x64xf32>
    %435 = vector.extract_strided_slice %431 {offsets = [0, 192], sizes = [8, 64], strides = [1, 1]} : vector<8x256xf32> to vector<8x64xf32>
    %436 = arith.mulf %433, %418 : vector<8x64xf32>
    %437 = arith.mulf %432, %434 : vector<8x64xf32>
    %438 = arith.addf %436, %437 : vector<8x64xf32>
    %439 = math.tanh %438 : vector<8x64xf32>
    %440 = arith.mulf %435, %439 : vector<8x64xf32>
    %441 = vector.shape_cast %26 : vector<1x64xi1> to vector<1x64xi1>
    %442 = vector.broadcast %441 : vector<1x64xi1> to vector<8x64xi1>
    %443 = arith.select %442, %300, %440 : vector<8x64xi1>, vector<8x64xf32>
    %444 = vector.shape_cast %26 : vector<1x64xi1> to vector<1x64xi1>
    %445 = vector.broadcast %444 : vector<1x64xi1> to vector<8x64xi1>
    %446 = arith.select %445, %440, %300 : vector<8x64xi1>, vector<8x64xf32>
    %447 = tpu.concatenate %443, %446 in 1 : vector<8x64xf32>, vector<8x64xf32> -> vector<8x128xf32>
    %c0_61 = arith.constant 0 : index
    %c0_62 = arith.constant 0 : index
    %448 = vector.load %arg5[%c0_61, %c0_62] : memref<8x128xf32, #tpu.memory_space<vmem>>, vector<8x128xf32>
    tpu.vector_store %arg5[%c0_61, %c0_62], %447 {strides = array<i32>} : memref<8x128xf32, #tpu.memory_space<vmem>>, vector<8x128xf32>,
    return
  }
}

</mosaic_0001>

<llo_original>
// kernel: birnn_forward.1
$region0: #{birnn_forward.1}
  #allocation0 [shape = 'u32[]', space=smem, size = 0x4, offset = 0x4, fixed_abs, tag = 'smem constant byte address 0x4 - core index']
  #allocation1 [shape = 'u32[72,128]{1,0:T(1,128)}', space=vmem, size = 0x9000, scoped, tag = 'internal scratch']
  %s0 = inlined_call_operand.vmem [shape: f32[64,256], index: 0, kind: input, shape index: {}]
  %s1 = inlined_call_operand.vmem [shape: bf16[64,256], index: 1, kind: input, shape index: {}]
  %s2 = inlined_call_operand.vmem [shape: bf16[64,256], index: 2, kind: input, shape index: {}]
  %s3 = inlined_call_operand.vmem [shape: bf16[64,256], index: 3, kind: input, shape index: {}]
  %s4 = inlined_call_operand.vmem [shape: f32[1,256], index: 4, kind: input, shape index: {}]
  %s5 = inlined_call_operand.vmem [shape: f32[8,128], index: 5, kind: output, shape index: {}]
  %s6 = sld [smem:[#allocation0]]
  $region30: #{birnn_forward.1} parent=0
    _
  %s8 = ssub.s32 1, %s6
  %s9 = scalar_select 0, %s8, %s6
  // Predicated region
  $region2: #{birnn_forward.1} parent=0 // pred_check
    _
  $region3: #{birnn_forward.1} parent=0 // pred_check_branch
    %11 = sbr.rel (0) target = $region5
  $region4: #{birnn_forward.1} parent=0 // pred_region
    _
  $region5: #{birnn_forward.1} parent=0 // pred_fallthru
    _
  // Predicated region
  $region6: #{birnn_forward.1} parent=0 // pred_check
    _
  $region7: #{birnn_forward.1} parent=0 // pred_check_branch
    %13 = sbr.rel (0) target = $region9
  $region8: #{birnn_forward.1} parent=0 // pred_region
    _
  $region9: #{birnn_forward.1} parent=0 // pred_fallthru
    _
  // Predicated region
  $region10: #{birnn_forward.1} parent=0 // pred_check
    _
  $region11: #{birnn_forward.1} parent=0 // pred_check_branch
    %15 = sbr.rel (0) target = $region13
  $region12: #{birnn_forward.1} parent=0 // pred_region
    _
  $region13: #{birnn_forward.1} parent=0 // pred_fallthru
    _
  // Predicated region
  $region14: #{birnn_forward.1} parent=0 // pred_check
    _
  $region15: #{birnn_forward.1} parent=0 // pred_check_branch
    %17 = sbr.rel (0) target = $region17
  $region16: #{birnn_forward.1} parent=0 // pred_region
    _
  $region17: #{birnn_forward.1} parent=0 // pred_fallthru
    _
  // Predicated region
  $region18: #{birnn_forward.1} parent=0 // pred_check
    _
  $region19: #{birnn_forward.1} parent=0 // pred_check_branch
    %19 = sbr.rel (0) target = $region21
  $region20: #{birnn_forward.1} parent=0 // pred_region
    _
  $region21: #{birnn_forward.1} parent=0 // pred_fallthru
    _
  %v21 = vlaneseq
  %v22 = vand.u32 %v21, 127
  %v23 = vadd.s32 %v22, 128
  %vm24 = vcmp.lt.s32.totalorder %v22, 0
  %v25 = vsub.s32 0, %v22
  %v26 = vsel %vm24, %v25, %v22
  %v27 = vshrl.u32 %v26, 6
  %v28 = vand.u32 %v26, 63
  %v29 = vsub.s32 0, %v28
  %v30 = vsel %vm24, %v29, %v28
  %vm31 = vcmp.lt.s32.totalorder %v23, 0
  %v32 = vsub.s32 0, %v23
  %v33 = vsel %vm31, %v32, %v23
  %v34 = vshrl.u32 %v33, 6
  %v35 = vand.u32 %v33, 63
  %v36 = vsub.s32 0, %v35
  %v37 = vsel %vm31, %v36, %v35
  %vm38 = vcmp.ne.s32.totalorder %v30, 0
  %vm39 = vcmp.ne.s32.totalorder %v37, 0
  %vm40 = vcmp.lt.s32.totalorder %v30, 0
  %vm41 = vcmp.lt.s32.totalorder %v37, 0
  %vm42 = vmand %vm40, %vm38
  %vm43 = vmand %vm41, %vm39
  %v44 = vadd.s32 %v30, 64
  %v45 = vadd.s32 %v37, 64
  %v46 = vsel %vm42, %v44, %v30
  %v47 = vsel %vm43, %v45, %v37
  %vm48 = vcmp.lt.s32.totalorder %v46, 32
  %vm49 = vcmp.lt.s32.totalorder %v47, 32
  %vm50 = vcmp.ge.s32.totalorder %v22, 128
  %vm51 = vcmp.ge.s32.totalorder %v23, 128
  %vm52 = vcmp.lt.s32.totalorder %v22, 192
  %vm53 = vcmp.lt.s32.totalorder %v23, 192
  %vm54 = vmand %vm50, %vm52
  %vm55 = vmand %vm51, %vm53
  %vm56 = vcmp.lt.s32.totalorder %v22, 32
  %v57 = vld [vmem:[%s0] sm:$0xff]
  %v58 = vld [vmem:[%s0 + $0x8] sm:$0xff]
  %v59 = vld [vmem:[%s0 + $0x10] sm:$0xff]
  %v60 = vld [vmem:[%s0 + $0x18] sm:$0xff]
  %v61 = vld [vmem:[%s0 + $0x20] sm:$0xff]
  %v62 = vld [vmem:[%s0 + $0x28] sm:$0xff]
  %v63 = vld [vmem:[%s0 + $0x30] sm:$0xff]
  %v64 = vld [vmem:[%s0 + $0x38] sm:$0xff]
  %v65 = vld [vmem:[%s0 + $0x40] sm:$0xff]
  %v66 = vld [vmem:[%s0 + $0x48] sm:$0xff]
  %v67 = vld [vmem:[%s0 + $0x50] sm:$0xff]
  %v68 = vld [vmem:[%s0 + $0x58] sm:$0xff]
  %v69 = vld [vmem:[%s0 + $0x60] sm:$0xff]
  %v70 = vld [vmem:[%s0 + $0x68] sm:$0xff]
  %v71 = vld [vmem:[%s0 + $0x70] sm:$0xff]
  %v72 = vld [vmem:[%s0 + $0x78] sm:$0xff]
  %v73 = vsel %vm48, 1, 0
  %v74 = vsel %vm49, 1, 0
  %vm75 = vcmp.eq.s32.totalorder %v73, 1
  %vm76 = vcmp.eq.s32.totalorder %v74, 1
  %v77 = vsel %vm75, %v57, %v71
  %v78 = vsel %vm76, %v58, %v72
  %v79 = vsel %vm75, %v59, %v69
  %v80 = vsel %vm76, %v60, %v70
  %v81 = vsel %vm75, %v61, %v67
  %v82 = vsel %vm76, %v62, %v68
  %v83 = vsel %vm75, %v63, %v65
  %v84 = vsel %vm76, %v64, %v66
  %v85 = vsel %vm75, %v65, %v63
  %v86 = vsel %vm76, %v66, %v64
  %v87 = vsel %vm75, %v67, %v61
  %v88 = vsel %vm76, %v68, %v62
  %v89 = vsel %vm75, %v69, %v59
  %v90 = vsel %vm76, %v70, %v60
  %v91 = vsel %vm75, %v71, %v57
  %v92 = vsel %vm76, %v72, %v58
  %v93 = vld [vmem:[%s1] sm:$0xff]
  %v94 = vld [vmem:[%s1 + $0x8] sm:$0xff]
  %v95 = vld [vmem:[%s1 + $0x10] sm:$0xff]
  %v96 = vld [vmem:[%s1 + $0x18] sm:$0xff]
  %v97 = vld [vmem:[%s1 + $0x20] sm:$0xff]
  %v98 = vld [vmem:[%s1 + $0x28] sm:$0xff]
  %v99 = vld [vmem:[%s1 + $0x30] sm:$0xff]
  %v100 = vld [vmem:[%s1 + $0x38] sm:$0xff]
  %v101 = vtanh.pop %v77
  %v102 = vtanh.pop %v78
  %v103 = vmul.f32 %v101, 0.5
  %v104 = vmul.f32 %v102, 0.5
  %v105 = vadd.f32 %v103, 0.5
  %v106 = vadd.f32 %v104, 0.5
  %v107 = vsel %vm54, 1, 0
  %v108 = vsel %vm55, 1, 0
  %vm109 = vcmp.eq.s32.totalorder %v107, 1
  %vm110 = vcmp.eq.s32.totalorder %v108, 1
  %v111 = vsel %vm109, %v101, %v105
  %v112 = vsel %vm110, %v102, %v106
  %v113 = vmul.f32 %v111, 0.0
  %v114 = vmul.f32 %v111, %v112
  %116 = vrot.lane.b32.xlu0 %v114, 64
  %v117 = vpop.permute.xlu0 %116
  %v119 = vadd.f32 %v113, %v117
  %v120 = vtanh.pop %v119
  %v121 = vmul.f32 %v112, %v120
  %v122 = vpack.c.bf16 %v121, %v121
  %124 = vrot.lane.b32.xlu0 %v122, 64
  %v125 = vpop.permute.xlu0 %124
  %v134 = vunpack.c.l.b16 %v93
  %v135 = vunpack.c.h.b16 %v93
  %v136 = vunpack.c.l.b16 %v94
  %v137 = vunpack.c.h.b16 %v94
  %v138 = vunpack.c.l.b16 %v95
  %v139 = vunpack.c.h.b16 %v95
  %v140 = vunpack.c.l.b16 %v96
  %v141 = vunpack.c.h.b16 %v96
  %v142 = vunpack.c.l.b16 %v97
  %v143 = vunpack.c.h.b16 %v97
  %v144 = vunpack.c.l.b16 %v98
  %v145 = vunpack.c.h.b16 %v98
  %v146 = vunpack.c.l.b16 %v99
  %v147 = vunpack.c.h.b16 %v99
  %v148 = vunpack.c.l.b16 %v100
  %v149 = vunpack.c.h.b16 %v100
  %v150 = vpack.c.b16 %v136, %v134
  %v151 = vpack.c.b16 %v137, %v135
  %v152 = vpack.c.b16 %v140, %v138
  %v153 = vpack.c.b16 %v141, %v139
  %v154 = vpack.c.b16 %v144, %v142
  %v155 = vpack.c.b16 %v145, %v143
  %v156 = vpack.c.b16 %v148, %v146
  %v157 = vpack.c.b16 %v149, %v147
  %vm166 = vcmask 523264
  %v168 = vsel %vm166, %v125, 0
  %170 = vmatpush.bf16.msra.mxu0 0
  %171 = vmatpush.bf16.msra.mxu0 0
  %172 = vmatpush.bf16.msra.mxu0 0
  %173 = vmatpush.bf16.msra.mxu0 0
  %174 = vmatpush.bf16.msra.mxu0 %v156
  %175 = vmatpush.bf16.msra.mxu0 %v154
  %176 = vmatpush.bf16.msra.mxu0 %v152
  %177 = vmatpush.bf16.msra.mxu0 %v150
  %178 = vmatmul.bf16.gmra.mxu0 %v168
  %v179 = vpop.f32.mrf.mxu0
  %v180 = vadd.f32 0.0, %v179
  %v181 = vpop.f32.mrf.mxu0
  %182 = vdwg.mxu0
  %183 = vmatpush.bf16.msra.mxu0 0
  %184 = vmatpush.bf16.msra.mxu0 0
  %185 = vmatpush.bf16.msra.mxu0 0
  %186 = vmatpush.bf16.msra.mxu0 0
  %187 = vmatpush.bf16.msra.mxu0 %v157
  %188 = vmatpush.bf16.msra.mxu0 %v155
  %189 = vmatpush.bf16.msra.mxu0 %v153
  %190 = vmatpush.bf16.msra.mxu0 %v151
  %191 = vmatmul.bf16.gmra.mxu0 %v168
  %v192 = vpop.f32.mrf.mxu0
  %v193 = vadd.f32 0.0, %v192
  %v194 = vpop.f32.mrf.mxu0
  %195 = vdwg.mxu0
  %v196 = vadd.f32 %v79, %v180
  %v197 = vadd.f32 %v80, %v193
  %v198 = vtanh.pop %v196
  %v199 = vtanh.pop %v197
  %v200 = vmul.f32 %v198, 0.5
  %v201 = vmul.f32 %v199, 0.5
  %v202 = vadd.f32 %v200, 0.5
  %v203 = vadd.f32 %v201, 0.5
  %v204 = vsel %vm109, %v198, %v202
  %v205 = vsel %vm110, %v199, %v203
  %v206 = vmul.f32 %v204, %v119
  %v207 = vmul.f32 %v204, %v205
  %209 = vrot.lane.b32.xlu0 %v207, 64
  %v210 = vpop.permute.xlu0 %209
  %v212 = vadd.f32 %v206, %v210
  %v213 = vtanh.pop %v212
  %v214 = vmul.f32 %v205, %v213
  %v215 = vpack.c.bf16 %v214, %v214
  %217 = vrot.lane.b32.xlu0 %v215, 64
  %v218 = vpop.permute.xlu0 %217
  %v220 = vsel %vm166, %v218, 0
  %222 = vmatpush.bf16.msra.mxu0 0
  %223 = vmatpush.bf16.msra.mxu0 0
  %224 = vmatpush.bf16.msra.mxu0 0
  %225 = vmatpush.bf16.msra.mxu0 0
  %226 = vmatpush.bf16.msra.mxu0 %v156
  %227 = vmatpush.bf16.msra.mxu0 %v154
  %228 = vmatpush.bf16.msra.mxu0 %v152
  %229 = vmatpush.bf16.msra.mxu0 %v150
  %230 = vmatmul.bf16.gmra.mxu0 %v220
  %v231 = vpop.f32.mrf.mxu0
  %v232 = vadd.f32 0.0, %v231
  %v233 = vpop.f32.mrf.mxu0
  %234 = vdwg.mxu0
  %235 = vmatpush.bf16.msra.mxu0 0
  %236 = vmatpush.bf16.msra.mxu0 0
  %237 = vmatpush.bf16.msra.mxu0 0
  %238 = vmatpush.bf16.msra.mxu0 0
  %239 = vmatpush.bf16.msra.mxu0 %v157
  %240 = vmatpush.bf16.msra.mxu0 %v155
  %241 = vmatpush.bf16.msra.mxu0 %v153
  %242 = vmatpush.bf16.msra.mxu0 %v151
  %243 = vmatmul.bf16.gmra.mxu0 %v220
  %v244 = vpop.f32.mrf.mxu0
  %v245 = vadd.f32 0.0, %v244
  %v246 = vpop.f32.mrf.mxu0
  %247 = vdwg.mxu0
  %v248 = vadd.f32 %v81, %v232
  %v249 = vadd.f32 %v82, %v245
  %v250 = vtanh.pop %v248
  %v251 = vtanh.pop %v249
  %v252 = vmul.f32 %v250, 0.5
  %v253 = vmul.f32 %v251, 0.5
  %v254 = vadd.f32 %v252, 0.5
  %v255 = vadd.f32 %v253, 0.5
  %v256 = vsel %vm109, %v250, %v254
  %v257 = vsel %vm110, %v251, %v255
  %v258 = vmul.f32 %v256, %v212
  %v259 = vmul.f32 %v256, %v257
  %261 = vrot.lane.b32.xlu0 %v259, 64
  %v262 = vpop.permute.xlu0 %261
  %v264 = vadd.f32 %v258, %v262
  %v265 = vtanh.pop %v264
  %v266 = vmul.f32 %v257, %v265
  %v267 = vpack.c.bf16 %v266, %v266
  %269 = vrot.lane.b32.xlu0 %v267, 64
  %v270 = vpop.permute.xlu0 %269
  %v272 = vsel %vm166, %v270, 0
  %274 = vmatpush.bf16.msra.mxu0 0
  %275 = vmatpush.bf16.msra.mxu0 0
  %276 = vmatpush.bf16.msra.mxu0 0
  %277 = vmatpush.bf16.msra.mxu0 0
  %278 = vmatpush.bf16.msra.mxu0 %v156
  %279 = vmatpush.bf16.msra.mxu0 %v154
  %280 = vmatpush.bf16.msra.mxu0 %v152
  %281 = vmatpush.bf16.msra.mxu0 %v150
  %282 = vmatmul.bf16.gmra.mxu0 %v272
  %v283 = vpop.f32.mrf.mxu0
  %v284 = vadd.f32 0.0, %v283
  %v285 = vpop.f32.mrf.mxu0
  %286 = vdwg.mxu0
  %287 = vmatpush.bf16.msra.mxu0 0
  %288 = vmatpush.bf16.msra.mxu0 0
  %289 = vmatpush.bf16.msra.mxu0 0
  %290 = vmatpush.bf16.msra.mxu0 0
  %291 = vmatpush.bf16.msra.mxu0 %v157
  %292 = vmatpush.bf16.msra.mxu0 %v155
  %293 = vmatpush.bf16.msra.mxu0 %v153
  %294 = vmatpush.bf16.msra.mxu0 %v151
  %295 = vmatmul.bf16.gmra.mxu0 %v272
  %v296 = vpop.f32.mrf.mxu0
  %v297 = vadd.f32 0.0, %v296
  %v298 = vpop.f32.mrf.mxu0
  %299 = vdwg.mxu0
  %v300 = vadd.f32 %v83, %v284
  %v301 = vadd.f32 %v84, %v297
  %v302 = vtanh.pop %v300
  %v303 = vtanh.pop %v301
  %v304 = vmul.f32 %v302, 0.5
  %v305 = vmul.f32 %v303, 0.5
  %v306 = vadd.f32 %v304, 0.5
  %v307 = vadd.f32 %v305, 0.5
  %v308 = vsel %vm109, %v302, %v306
  %v309 = vsel %vm110, %v303, %v307
  %v310 = vmul.f32 %v308, %v264
  %v311 = vmul.f32 %v308, %v309
  %313 = vrot.lane.b32.xlu0 %v311, 64
  %v314 = vpop.permute.xlu0 %313
  %v316 = vadd.f32 %v310, %v314
  %v317 = vtanh.pop %v316
  %v318 = vmul.f32 %v309, %v317
  %v319 = vpack.c.bf16 %v318, %v318
  %321 = vrot.lane.b32.xlu0 %v319, 64
  %v322 = vpop.permute.xlu0 %321
  %v324 = vsel %vm166, %v322, 0
  %326 = vmatpush.bf16.msra.mxu0 0
  %327 = vmatpush.bf16.msra.mxu0 0
  %328 = vmatpush.bf16.msra.mxu0 0
  %329 = vmatpush.bf16.msra.mxu0 0
  %330 = vmatpush.bf16.msra.mxu0 %v156
  %331 = vmatpush.bf16.msra.mxu0 %v154
  %332 = vmatpush.bf16.msra.mxu0 %v152
  %333 = vmatpush.bf16.msra.mxu0 %v150
  %334 = vmatmul.bf16.gmra.mxu0 %v324
  %v335 = vpop.f32.mrf.mxu0
  %v336 = vadd.f32 0.0, %v335
  %v337 = vpop.f32.mrf.mxu0
  %338 = vdwg.mxu0
  %339 = vmatpush.bf16.msra.mxu0 0
  %340 = vmatpush.bf16.msra.mxu0 0
  %341 = vmatpush.bf16.msra.mxu0 0
  %342 = vmatpush.bf16.msra.mxu0 0
  %343 = vmatpush.bf16.msra.mxu0 %v157
  %344 = vmatpush.bf16.msra.mxu0 %v155
  %345 = vmatpush.bf16.msra.mxu0 %v153
  %346 = vmatpush.bf16.msra.mxu0 %v151
  %347 = vmatmul.bf16.gmra.mxu0 %v324
  %v348 = vpop.f32.mrf.mxu0
  %v349 = vadd.f32 0.0, %v348
  %v350 = vpop.f32.mrf.mxu0
  %351 = vdwg.mxu0
  %v352 = vadd.f32 %v85, %v336
  %v353 = vadd.f32 %v86, %v349
  %v354 = vtanh.pop %v352
  %v355 = vtanh.pop %v353
  %v356 = vmul.f32 %v354, 0.5
  %v357 = vmul.f32 %v355, 0.5
  %v358 = vadd.f32 %v356, 0.5
  %v359 = vadd.f32 %v357, 0.5
  %v360 = vsel %vm109, %v354, %v358
  %v361 = vsel %vm110, %v355, %v359
  %v362 = vmul.f32 %v360, %v316
  %v363 = vmul.f32 %v360, %v361
  %365 = vrot.lane.b32.xlu0 %v363, 64
  %v366 = vpop.permute.xlu0 %365
  %v368 = vadd.f32 %v362, %v366
  %v369 = vtanh.pop %v368
  %v370 = vmul.f32 %v361, %v369
  %v371 = vpack.c.bf16 %v370, %v370
  %373 = vrot.lane.b32.xlu0 %v371, 64
  %v374 = vpop.permute.xlu0 %373
  %v376 = vsel %vm166, %v374, 0
  %378 = vmatpush.bf16.msra.mxu0 0
  %379 = vmatpush.bf16.msra.mxu0 0
  %380 = vmatpush.bf16.msra.mxu0 0
  %381 = vmatpush.bf16.msra.mxu0 0
  %382 = vmatpush.bf16.msra.mxu0 %v156
  %383 = vmatpush.bf16.msra.mxu0 %v154
  %384 = vmatpush.bf16.msra.mxu0 %v152
  %385 = vmatpush.bf16.msra.mxu0 %v150
  %386 = vmatmul.bf16.gmra.mxu0 %v376
  %v387 = vpop.f32.mrf.mxu0
  %v388 = vadd.f32 0.0, %v387
  %v389 = vpop.f32.mrf.mxu0
  %390 = vdwg.mxu0
  %391 = vmatpush.bf16.msra.mxu0 0
  %392 = vmatpush.bf16.msra.mxu0 0
  %393 = vmatpush.bf16.msra.mxu0 0
  %394 = vmatpush.bf16.msra.mxu0 0
  %395 = vmatpush.bf16.msra.mxu0 %v157
  %396 = vmatpush.bf16.msra.mxu0 %v155
  %397 = vmatpush.bf16.msra.mxu0 %v153
  %398 = vmatpush.bf16.msra.mxu0 %v151
  %399 = vmatmul.bf16.gmra.mxu0 %v376
  %v400 = vpop.f32.mrf.mxu0
  %v401 = vadd.f32 0.0, %v400
  %v402 = vpop.f32.mrf.mxu0
  %403 = vdwg.mxu0
  %v404 = vadd.f32 %v87, %v388
  %v405 = vadd.f32 %v88, %v401
  %v406 = vtanh.pop %v404
  %v407 = vtanh.pop %v405
  %v408 = vmul.f32 %v406, 0.5
  %v409 = vmul.f32 %v407, 0.5
  %v410 = vadd.f32 %v408, 0.5
  %v411 = vadd.f32 %v409, 0.5
  %v412 = vsel %vm109, %v406, %v410
  %v413 = vsel %vm110, %v407, %v411
  %v414 = vmul.f32 %v412, %v368
  %v415 = vmul.f32 %v412, %v413
  %417 = vrot.lane.b32.xlu0 %v415, 64
  %v418 = vpop.permute.xlu0 %417
  %v420 = vadd.f32 %v414, %v418
  %v421 = vtanh.pop %v420
  %v422 = vmul.f32 %v413, %v421
  %v423 = vpack.c.bf16 %v422, %v422
  %425 = vrot.lane.b32.xlu0 %v423, 64
  %v426 = vpop.permute.xlu0 %425
  %v428 = vsel %vm166, %v426, 0
  %430 = vmatpush.bf16.msra.mxu0 0
  %431 = vmatpush.bf16.msra.mxu0 0
  %432 = vmatpush.bf16.msra.mxu0 0
  %433 = vmatpush.bf16.msra.mxu0 0
  %434 = vmatpush.bf16.msra.mxu0 %v156
  %435 = vmatpush.bf16.msra.mxu0 %v154
  %436 = vmatpush.bf16.msra.mxu0 %v152
  %437 = vmatpush.bf16.msra.mxu0 %v150
  %438 = vmatmul.bf16.gmra.mxu0 %v428
  %v439 = vpop.f32.mrf.mxu0
  %v440 = vadd.f32 0.0, %v439
  %v441 = vpop.f32.mrf.mxu0
  %442 = vdwg.mxu0
  %443 = vmatpush.bf16.msra.mxu0 0
  %444 = vmatpush.bf16.msra.mxu0 0
  %445 = vmatpush.bf16.msra.mxu0 0
  %446 = vmatpush.bf16.msra.mxu0 0
  %447 = vmatpush.bf16.msra.mxu0 %v157
  %448 = vmatpush.bf16.msra.mxu0 %v155
  %449 = vmatpush.bf16.msra.mxu0 %v153
  %450 = vmatpush.bf16.msra.mxu0 %v151
  %451 = vmatmul.bf16.gmra.mxu0 %v428
  %v452 = vpop.f32.mrf.mxu0
  %v453 = vadd.f32 0.0, %v452
  %v454 = vpop.f32.mrf.mxu0
  %455 = vdwg.mxu0
  %v456 = vadd.f32 %v89, %v440
  %v457 = vadd.f32 %v90, %v453
  %v458 = vtanh.pop %v456
  %v459 = vtanh.pop %v457
  %v460 = vmul.f32 %v458, 0.5
  %v461 = vmul.f32 %v459, 0.5
  %v462 = vadd.f32 %v460, 0.5
  %v463 = vadd.f32 %v461, 0.5
  %v464 = vsel %vm109, %v458, %v462
  %v465 = vsel %vm110, %v459, %v463
  %v466 = vmul.f32 %v464, %v420
  %v467 = vmul.f32 %v464, %v465
  %469 = vrot.lane.b32.xlu0 %v467, 64
  %v470 = vpop.permute.xlu0 %469
  %v472 = vadd.f32 %v466, %v470
  %v473 = vtanh.pop %v472
  %v474 = vmul.f32 %v465, %v473
  %v475 = vpack.c.bf16 %v474, %v474
  %477 = vrot.lane.b32.xlu0 %v475, 64
  %v478 = vpop.permute.xlu0 %477
  %v480 = vsel %vm166, %v478, 0
  %482 = vmatpush.bf16.msra.mxu0 0
  %483 = vmatpush.bf16.msra.mxu0 0
  %484 = vmatpush.bf16.msra.mxu0 0
  %485 = vmatpush.bf16.msra.mxu0 0
  %486 = vmatpush.bf16.msra.mxu0 %v156
  %487 = vmatpush.bf16.msra.mxu0 %v154
  %488 = vmatpush.bf16.msra.mxu0 %v152
  %489 = vmatpush.bf16.msra.mxu0 %v150
  %490 = vmatmul.bf16.gmra.mxu0 %v480
  %v491 = vpop.f32.mrf.mxu0
  %v492 = vadd.f32 0.0, %v491
  %v493 = vpop.f32.mrf.mxu0
  %494 = vdwg.mxu0
  %495 = vmatpush.bf16.msra.mxu0 0
  %496 = vmatpush.bf16.msra.mxu0 0
  %497 = vmatpush.bf16.msra.mxu0 0
  %498 = vmatpush.bf16.msra.mxu0 0
  %499 = vmatpush.bf16.msra.mxu0 %v157
  %500 = vmatpush.bf16.msra.mxu0 %v155
  %501 = vmatpush.bf16.msra.mxu0 %v153
  %502 = vmatpush.bf16.msra.mxu0 %v151
  %503 = vmatmul.bf16.gmra.mxu0 %v480
  %v504 = vpop.f32.mrf.mxu0
  %v505 = vadd.f32 0.0, %v504
  %v506 = vpop.f32.mrf.mxu0
  %507 = vdwg.mxu0
  %v508 = vadd.f32 %v91, %v492
  %v509 = vadd.f32 %v92, %v505
  %v510 = vtanh.pop %v508
  %v511 = vtanh.pop %v509
  %v512 = vmul.f32 %v510, 0.5
  %v513 = vmul.f32 %v511, 0.5
  %v514 = vadd.f32 %v512, 0.5
  %v515 = vadd.f32 %v513, 0.5
  %v516 = vsel %vm109, %v510, %v514
  %v517 = vsel %vm110, %v511, %v515
  %v518 = vmul.f32 %v516, %v472
  %v519 = vmul.f32 %v516, %v517
  %521 = vrot.lane.b32.xlu0 %v519, 64
  %v522 = vpop.permute.xlu0 %521
  %v524 = vadd.f32 %v518, %v522
  %v525 = vtanh.pop %v524
  %v526 = vmul.f32 %v517, %v525
  %v527 = vsel %vm56, 1, 0
  %vm528 = vcmp.eq.s32.totalorder %v527, 1
  %530 = vrot.lane.b32.xlu0 %v121, 64
  %v531 = vpop.permute.xlu0 %530
  %534 = vrot.lane.b32.xlu0 %v526, 64
  %v535 = vpop.permute.xlu0 %534
  %v537 = vsel %vm528, %v531, %v535
  %539 = vrot.lane.b32.xlu0 %v214, 64
  %v540 = vpop.permute.xlu0 %539
  %543 = vrot.lane.b32.xlu0 %v474, 64
  %v544 = vpop.permute.xlu0 %543
  %v546 = vsel %vm528, %v540, %v544
  %548 = vrot.lane.b32.xlu0 %v266, 64
  %v549 = vpop.permute.xlu0 %548
  %552 = vrot.lane.b32.xlu0 %v422, 64
  %v553 = vpop.permute.xlu0 %552
  %v555 = vsel %vm528, %v549, %v553
  %557 = vrot.lane.b32.xlu0 %v318, 64
  %v558 = vpop.permute.xlu0 %557
  %561 = vrot.lane.b32.xlu0 %v370, 64
  %v562 = vpop.permute.xlu0 %561
  %v564 = vsel %vm528, %v558, %v562
  %v565 = vsel %vm528, %v562, %v558
  %v566 = vsel %vm528, %v553, %v549
  %v567 = vsel %vm528, %v544, %v540
  %v568 = vsel %vm528, %v535, %v531
  %v569 = vpack.c.bf16 %v546, %v537
  %v570 = vpack.c.bf16 %v564, %v555
  %v571 = vpack.c.bf16 %v566, %v565
  %v572 = vpack.c.bf16 %v568, %v567
  %v573 = vld [vmem:[%s2] sm:$0xff]
  %v574 = vld [vmem:[%s2 + $0x8] sm:$0xff]
  %v575 = vld [vmem:[%s2 + $0x10] sm:$0xff]
  %v576 = vld [vmem:[%s2 + $0x18] sm:$0xff]
  %v577 = vld [vmem:[%s2 + $0x20] sm:$0xff]
  %v578 = vld [vmem:[%s2 + $0x28] sm:$0xff]
  %v579 = vld [vmem:[%s2 + $0x30] sm:$0xff]
  %v580 = vld [vmem:[%s2 + $0x38] sm:$0xff]
  %v581 = vld [vmem:[%s4] sm:$0x3]
  %v583 = vperm.slane %v581, 0
  %v584 = vperm.slane %v581, 1
  %v595 = vunpack.c.l.b16 %v573
  %v596 = vunpack.c.h.b16 %v573
  %v597 = vunpack.c.l.b16 %v574
  %v598 = vunpack.c.h.b16 %v574
  %v599 = vunpack.c.l.b16 %v575
  %v600 = vunpack.c.h.b16 %v575
  %v601 = vunpack.c.l.b16 %v576
  %v602 = vunpack.c.h.b16 %v576
  %v603 = vunpack.c.l.b16 %v577
  %v604 = vunpack.c.h.b16 %v577
  %v605 = vunpack.c.l.b16 %v578
  %v606 = vunpack.c.h.b16 %v578
  %v607 = vunpack.c.l.b16 %v579
  %v608 = vunpack.c.h.b16 %v579
  %v609 = vunpack.c.l.b16 %v580
  %v610 = vunpack.c.h.b16 %v580
  %v611 = vpack.c.b16 %v597, %v595
  %v612 = vpack.c.b16 %v598, %v596
  %v613 = vpack.c.b16 %v601, %v599
  %v614 = vpack.c.b16 %v602, %v600
  %v615 = vpack.c.b16 %v605, %v603
  %v616 = vpack.c.b16 %v606, %v604
  %v617 = vpack.c.b16 %v609, %v607
  %v618 = vpack.c.b16 %v610, %v608
  %v628 = vsel %vm166, %v569, 0
  %v631 = vsel %vm166, %v570, 0
  %v634 = vsel %vm166, %v571, 0
  %v637 = vsel %vm166, %v572, 0
  %639 = vmatpush.bf16.msra.mxu0 0
  %640 = vmatpush.bf16.msra.mxu0 0
  %641 = vmatpush.bf16.msra.mxu0 0
  %642 = vmatpush.bf16.msra.mxu0 0
  %643 = vmatpush.bf16.msra.mxu0 %v617
  %644 = vmatpush.bf16.msra.mxu0 %v615
  %645 = vmatpush.bf16.msra.mxu0 %v613
  %646 = vmatpush.bf16.msra.mxu0 %v611
  %647 = vmatmul.bf16.gmra.mxu0 %v628
  %v648 = vpop.f32.mrf.mxu0
  %v649 = vadd.f32 %v583, %v648
  %v650 = vpop.f32.mrf.mxu0
  %v651 = vadd.f32 %v583, %v650
  %652 = vmatmul.bf16.gmra.mxu0 %v631
  %v653 = vpop.f32.mrf.mxu0
  %v654 = vadd.f32 %v583, %v653
  %v655 = vpop.f32.mrf.mxu0
  %v656 = vadd.f32 %v583, %v655
  %657 = vmatmul.bf16.gmra.mxu0 %v634
  %v658 = vpop.f32.mrf.mxu0
  %v659 = vadd.f32 %v583, %v658
  %v660 = vpop.f32.mrf.mxu0
  %v661 = vadd.f32 %v583, %v660
  %662 = vmatmul.bf16.gmra.mxu0 %v637
  %v663 = vpop.f32.mrf.mxu0
  %v664 = vadd.f32 %v583, %v663
  %v665 = vpop.f32.mrf.mxu0
  %v666 = vadd.f32 %v583, %v665
  %667 = vdwg.mxu0
  %668 = vmatpush.bf16.msra.mxu0 0
  %669 = vmatpush.bf16.msra.mxu0 0
  %670 = vmatpush.bf16.msra.mxu0 0
  %671 = vmatpush.bf16.msra.mxu0 0
  %672 = vmatpush.bf16.msra.mxu0 %v618
  %673 = vmatpush.bf16.msra.mxu0 %v616
  %674 = vmatpush.bf16.msra.mxu0 %v614
  %675 = vmatpush.bf16.msra.mxu0 %v612
  %676 = vmatmul.bf16.gmra.mxu0 %v628
  %v677 = vpop.f32.mrf.mxu0
  %v678 = vadd.f32 %v584, %v677
  %v679 = vpop.f32.mrf.mxu0
  %v680 = vadd.f32 %v584, %v679
  %681 = vmatmul.bf16.gmra.mxu0 %v631
  %v682 = vpop.f32.mrf.mxu0
  %v683 = vadd.f32 %v584, %v682
  %v684 = vpop.f32.mrf.mxu0
  %v685 = vadd.f32 %v584, %v684
  %686 = vmatmul.bf16.gmra.mxu0 %v634
  %v687 = vpop.f32.mrf.mxu0
  %v688 = vadd.f32 %v584, %v687
  %v689 = vpop.f32.mrf.mxu0
  %v690 = vadd.f32 %v584, %v689
  %691 = vmatmul.bf16.gmra.mxu0 %v637
  %v692 = vpop.f32.mrf.mxu0
  %v693 = vadd.f32 %v584, %v692
  %v694 = vpop.f32.mrf.mxu0
  %v695 = vadd.f32 %v584, %v694
  %696 = vdwg.mxu0
  %v697 = vsel %vm75, %v649, %v666
  %v698 = vsel %vm76, %v678, %v695
  %v699 = vsel %vm75, %v651, %v664
  %v700 = vsel %vm76, %v680, %v693
  %v701 = vsel %vm75, %v654, %v661
  %v702 = vsel %vm76, %v683, %v690
  %v703 = vsel %vm75, %v656, %v659
  %v704 = vsel %vm76, %v685, %v688
  %v705 = vsel %vm75, %v659, %v656
  %v706 = vsel %vm76, %v688, %v685
  %v707 = vsel %vm75, %v661, %v654
  %v708 = vsel %vm76, %v690, %v683
  %v709 = vsel %vm75, %v664, %v651
  %v710 = vsel %vm76, %v693, %v680
  %v711 = vsel %vm75, %v666, %v649
  %v712 = vsel %vm76, %v695, %v678
  %v713 = vld [vmem:[%s3] sm:$0xff]
  %v714 = vld [vmem:[%s3 + $0x8] sm:$0xff]
  %v715 = vld [vmem:[%s3 + $0x10] sm:$0xff]
  %v716 = vld [vmem:[%s3 + $0x18] sm:$0xff]
  %v717 = vld [vmem:[%s3 + $0x20] sm:$0xff]
  %v718 = vld [vmem:[%s3 + $0x28] sm:$0xff]
  %v719 = vld [vmem:[%s3 + $0x30] sm:$0xff]
  %v720 = vld [vmem:[%s3 + $0x38] sm:$0xff]
  %v721 = vtanh.pop %v697
  %v722 = vtanh.pop %v698
  %v723 = vmul.f32 %v721, 0.5
  %v724 = vmul.f32 %v722, 0.5
  %v725 = vadd.f32 %v723, 0.5
  %v726 = vadd.f32 %v724, 0.5
  %v727 = vsel %vm109, %v721, %v725
  %v728 = vsel %vm110, %v722, %v726
  %v729 = vmul.f32 %v727, 0.0
  %v730 = vmul.f32 %v727, %v728
  %732 = vrot.lane.b32.xlu0 %v730, 64
  %v733 = vpop.permute.xlu0 %732
  %v735 = vadd.f32 %v729, %v733
  %v736 = vtanh.pop %v735
  %v737 = vmul.f32 %v728, %v736
  %v738 = vpack.c.bf16 %v737, %v737
  %740 = vrot.lane.b32.xlu0 %v738, 64
  %v741 = vpop.permute.xlu0 %740
  %v750 = vunpack.c.l.b16 %v713
  %v751 = vunpack.c.h.b16 %v713
  %v752 = vunpack.c.l.b16 %v714
  %v753 = vunpack.c.h.b16 %v714
  %v754 = vunpack.c.l.b16 %v715
  %v755 = vunpack.c.h.b16 %v715
  %v756 = vunpack.c.l.b16 %v716
  %v757 = vunpack.c.h.b16 %v716
  %v758 = vunpack.c.l.b16 %v717
  %v759 = vunpack.c.h.b16 %v717
  %v760 = vunpack.c.l.b16 %v718
  %v761 = vunpack.c.h.b16 %v718
  %v762 = vunpack.c.l.b16 %v719
  %v763 = vunpack.c.h.b16 %v719
  %v764 = vunpack.c.l.b16 %v720
  %v765 = vunpack.c.h.b16 %v720
  %v766 = vpack.c.b16 %v752, %v750
  %v767 = vpack.c.b16 %v753, %v751
  %v768 = vpack.c.b16 %v756, %v754
  %v769 = vpack.c.b16 %v757, %v755
  %v770 = vpack.c.b16 %v760, %v758
  %v771 = vpack.c.b16 %v761, %v759
  %v772 = vpack.c.b16 %v764, %v762
  %v773 = vpack.c.b16 %v765, %v763
  %v783 = vsel %vm166, %v741, 0
  %785 = vmatpush.bf16.msra.mxu0 0
  %786 = vmatpush.bf16.msra.mxu0 0
  %787 = vmatpush.bf16.msra.mxu0 0
  %788 = vmatpush.bf16.msra.mxu0 0
  %789 = vmatpush.bf16.msra.mxu0 %v772
  %790 = vmatpush.bf16.msra.mxu0 %v770
  %791 = vmatpush.bf16.msra.mxu0 %v768
  %792 = vmatpush.bf16.msra.mxu0 %v766
  %793 = vmatmul.bf16.gmra.mxu0 %v783
  %v794 = vpop.f32.mrf.mxu0
  %v795 = vadd.f32 0.0, %v794
  %v796 = vpop.f32.mrf.mxu0
  %797 = vdwg.mxu0
  %798 = vmatpush.bf16.msra.mxu0 0
  %799 = vmatpush.bf16.msra.mxu0 0
  %800 = vmatpush.bf16.msra.mxu0 0
  %801 = vmatpush.bf16.msra.mxu0 0
  %802 = vmatpush.bf16.msra.mxu0 %v773
  %803 = vmatpush.bf16.msra.mxu0 %v771
  %804 = vmatpush.bf16.msra.mxu0 %v769
  %805 = vmatpush.bf16.msra.mxu0 %v767
  %806 = vmatmul.bf16.gmra.mxu0 %v783
  %v807 = vpop.f32.mrf.mxu0
  %v808 = vadd.f32 0.0, %v807
  %v809 = vpop.f32.mrf.mxu0
  %810 = vdwg.mxu0
  %v811 = vadd.f32 %v699, %v795
  %v812 = vadd.f32 %v700, %v808
  %v813 = vtanh.pop %v811
  %v814 = vtanh.pop %v812
  %v815 = vmul.f32 %v813, 0.5
  %v816 = vmul.f32 %v814, 0.5
  %v817 = vadd.f32 %v815, 0.5
  %v818 = vadd.f32 %v816, 0.5
  %v819 = vsel %vm109, %v813, %v817
  %v820 = vsel %vm110, %v814, %v818
  %v821 = vmul.f32 %v819, %v735
  %v822 = vmul.f32 %v819, %v820
  %824 = vrot.lane.b32.xlu0 %v822, 64
  %v825 = vpop.permute.xlu0 %824
  %v827 = vadd.f32 %v821, %v825
  %v828 = vtanh.pop %v827
  %v829 = vmul.f32 %v820, %v828
  %v830 = vpack.c.bf16 %v829, %v829
  %832 = vrot.lane.b32.xlu0 %v830, 64
  %v833 = vpop.permute.xlu0 %832
  %v835 = vsel %vm166, %v833, 0
  %837 = vmatpush.bf16.msra.mxu0 0
  %838 = vmatpush.bf16.msra.mxu0 0
  %839 = vmatpush.bf16.msra.mxu0 0
  %840 = vmatpush.bf16.msra.mxu0 0
  %841 = vmatpush.bf16.msra.mxu0 %v772
  %842 = vmatpush.bf16.msra.mxu0 %v770
  %843 = vmatpush.bf16.msra.mxu0 %v768
  %844 = vmatpush.bf16.msra.mxu0 %v766
  %845 = vmatmul.bf16.gmra.mxu0 %v835
  %v846 = vpop.f32.mrf.mxu0
  %v847 = vadd.f32 0.0, %v846
  %v848 = vpop.f32.mrf.mxu0
  %849 = vdwg.mxu0
  %850 = vmatpush.bf16.msra.mxu0 0
  %851 = vmatpush.bf16.msra.mxu0 0
  %852 = vmatpush.bf16.msra.mxu0 0
  %853 = vmatpush.bf16.msra.mxu0 0
  %854 = vmatpush.bf16.msra.mxu0 %v773
  %855 = vmatpush.bf16.msra.mxu0 %v771
  %856 = vmatpush.bf16.msra.mxu0 %v769
  %857 = vmatpush.bf16.msra.mxu0 %v767
  %858 = vmatmul.bf16.gmra.mxu0 %v835
  %v859 = vpop.f32.mrf.mxu0
  %v860 = vadd.f32 0.0, %v859
  %v861 = vpop.f32.mrf.mxu0
  %862 = vdwg.mxu0
  %v863 = vadd.f32 %v701, %v847
  %v864 = vadd.f32 %v702, %v860
  %v865 = vtanh.pop %v863
  %v866 = vtanh.pop %v864
  %v867 = vmul.f32 %v865, 0.5
  %v868 = vmul.f32 %v866, 0.5
  %v869 = vadd.f32 %v867, 0.5
  %v870 = vadd.f32 %v868, 0.5
  %v871 = vsel %vm109, %v865, %v869
  %v872 = vsel %vm110, %v866, %v870
  %v873 = vmul.f32 %v871, %v827
  %v874 = vmul.f32 %v871, %v872
  %876 = vrot.lane.b32.xlu0 %v874, 64
  %v877 = vpop.permute.xlu0 %876
  %v879 = vadd.f32 %v873, %v877
  %v880 = vtanh.pop %v879
  %v881 = vmul.f32 %v872, %v880
  %v882 = vpack.c.bf16 %v881, %v881
  %884 = vrot.lane.b32.xlu0 %v882, 64
  %v885 = vpop.permute.xlu0 %884
  %v887 = vsel %vm166, %v885, 0
  %889 = vmatpush.bf16.msra.mxu0 0
  %890 = vmatpush.bf16.msra.mxu0 0
  %891 = vmatpush.bf16.msra.mxu0 0
  %892 = vmatpush.bf16.msra.mxu0 0
  %893 = vmatpush.bf16.msra.mxu0 %v772
  %894 = vmatpush.bf16.msra.mxu0 %v770
  %895 = vmatpush.bf16.msra.mxu0 %v768
  %896 = vmatpush.bf16.msra.mxu0 %v766
  %897 = vmatmul.bf16.gmra.mxu0 %v887
  %v898 = vpop.f32.mrf.mxu0
  %v899 = vadd.f32 0.0, %v898
  %v900 = vpop.f32.mrf.mxu0
  %901 = vdwg.mxu0
  %902 = vmatpush.bf16.msra.mxu0 0
  %903 = vmatpush.bf16.msra.mxu0 0
  %904 = vmatpush.bf16.msra.mxu0 0
  %905 = vmatpush.bf16.msra.mxu0 0
  %906 = vmatpush.bf16.msra.mxu0 %v773
  %907 = vmatpush.bf16.msra.mxu0 %v771
  %908 = vmatpush.bf16.msra.mxu0 %v769
  %909 = vmatpush.bf16.msra.mxu0 %v767
  %910 = vmatmul.bf16.gmra.mxu0 %v887
  %v911 = vpop.f32.mrf.mxu0
  %v912 = vadd.f32 0.0, %v911
  %v913 = vpop.f32.mrf.mxu0
  %914 = vdwg.mxu0
  %v915 = vadd.f32 %v703, %v899
  %v916 = vadd.f32 %v704, %v912
  %v917 = vtanh.pop %v915
  %v918 = vtanh.pop %v916
  %v919 = vmul.f32 %v917, 0.5
  %v920 = vmul.f32 %v918, 0.5
  %v921 = vadd.f32 %v919, 0.5
  %v922 = vadd.f32 %v920, 0.5
  %v923 = vsel %vm109, %v917, %v921
  %v924 = vsel %vm110, %v918, %v922
  %v925 = vmul.f32 %v923, %v879
  %v926 = vmul.f32 %v923, %v924
  %928 = vrot.lane.b32.xlu0 %v926, 64
  %v929 = vpop.permute.xlu0 %928
  %v931 = vadd.f32 %v925, %v929
  %v932 = vtanh.pop %v931
  %v933 = vmul.f32 %v924, %v932
  %v934 = vpack.c.bf16 %v933, %v933
  %936 = vrot.lane.b32.xlu0 %v934, 64
  %v937 = vpop.permute.xlu0 %936
  %v939 = vsel %vm166, %v937, 0
  %941 = vmatpush.bf16.msra.mxu0 0
  %942 = vmatpush.bf16.msra.mxu0 0
  %943 = vmatpush.bf16.msra.mxu0 0
  %944 = vmatpush.bf16.msra.mxu0 0
  %945 = vmatpush.bf16.msra.mxu0 %v772
  %946 = vmatpush.bf16.msra.mxu0 %v770
  %947 = vmatpush.bf16.msra.mxu0 %v768
  %948 = vmatpush.bf16.msra.mxu0 %v766
  %949 = vmatmul.bf16.gmra.mxu0 %v939
  %v950 = vpop.f32.mrf.mxu0
  %v951 = vadd.f32 0.0, %v950
  %v952 = vpop.f32.mrf.mxu0
  %953 = vdwg.mxu0
  %954 = vmatpush.bf16.msra.mxu0 0
  %955 = vmatpush.bf16.msra.mxu0 0
  %956 = vmatpush.bf16.msra.mxu0 0
  %957 = vmatpush.bf16.msra.mxu0 0
  %958 = vmatpush.bf16.msra.mxu0 %v773
  %959 = vmatpush.bf16.msra.mxu0 %v771
  %960 = vmatpush.bf16.msra.mxu0 %v769
  %961 = vmatpush.bf16.msra.mxu0 %v767
  %962 = vmatmul.bf16.gmra.mxu0 %v939
  %v963 = vpop.f32.mrf.mxu0
  %v964 = vadd.f32 0.0, %v963
  %v965 = vpop.f32.mrf.mxu0
  %966 = vdwg.mxu0
  %v967 = vadd.f32 %v705, %v951
  %v968 = vadd.f32 %v706, %v964
  %v969 = vtanh.pop %v967
  %v970 = vtanh.pop %v968
  %v971 = vmul.f32 %v969, 0.5
  %v972 = vmul.f32 %v970, 0.5
  %v973 = vadd.f32 %v971, 0.5
  %v974 = vadd.f32 %v972, 0.5
  %v975 = vsel %vm109, %v969, %v973
  %v976 = vsel %vm110, %v970, %v974
  %v977 = vmul.f32 %v975, %v931
  %v978 = vmul.f32 %v975, %v976
  %980 = vrot.lane.b32.xlu0 %v978, 64
  %v981 = vpop.permute.xlu0 %980
  %v983 = vadd.f32 %v977, %v981
  %v984 = vtanh.pop %v983
  %v985 = vmul.f32 %v976, %v984
  %v986 = vpack.c.bf16 %v985, %v985
  %988 = vrot.lane.b32.xlu0 %v986, 64
  %v989 = vpop.permute.xlu0 %988
  %v991 = vsel %vm166, %v989, 0
  %993 = vmatpush.bf16.msra.mxu0 0
  %994 = vmatpush.bf16.msra.mxu0 0
  %995 = vmatpush.bf16.msra.mxu0 0
  %996 = vmatpush.bf16.msra.mxu0 0
  %997 = vmatpush.bf16.msra.mxu0 %v772
  %998 = vmatpush.bf16.msra.mxu0 %v770
  %999 = vmatpush.bf16.msra.mxu0 %v768
  %1000 = vmatpush.bf16.msra.mxu0 %v766
  %1001 = vmatmul.bf16.gmra.mxu0 %v991
  %v1002 = vpop.f32.mrf.mxu0
  %v1003 = vadd.f32 0.0, %v1002
  %v1004 = vpop.f32.mrf.mxu0
  %1005 = vdwg.mxu0
  %1006 = vmatpush.bf16.msra.mxu0 0
  %1007 = vmatpush.bf16.msra.mxu0 0
  %1008 = vmatpush.bf16.msra.mxu0 0
  %1009 = vmatpush.bf16.msra.mxu0 0
  %1010 = vmatpush.bf16.msra.mxu0 %v773
  %1011 = vmatpush.bf16.msra.mxu0 %v771
  %1012 = vmatpush.bf16.msra.mxu0 %v769
  %1013 = vmatpush.bf16.msra.mxu0 %v767
  %1014 = vmatmul.bf16.gmra.mxu0 %v991
  %v1015 = vpop.f32.mrf.mxu0
  %v1016 = vadd.f32 0.0, %v1015
  %v1017 = vpop.f32.mrf.mxu0
  %1018 = vdwg.mxu0
  %v1019 = vadd.f32 %v707, %v1003
  %v1020 = vadd.f32 %v708, %v1016
  %v1021 = vtanh.pop %v1019
  %v1022 = vtanh.pop %v1020
  %v1023 = vmul.f32 %v1021, 0.5
  %v1024 = vmul.f32 %v1022, 0.5
  %v1025 = vadd.f32 %v1023, 0.5
  %v1026 = vadd.f32 %v1024, 0.5
  %v1027 = vsel %vm109, %v1021, %v1025
  %v1028 = vsel %vm110, %v1022, %v1026
  %v1029 = vmul.f32 %v1027, %v983
  %v1030 = vmul.f32 %v1027, %v1028
  %1032 = vrot.lane.b32.xlu0 %v1030, 64
  %v1033 = vpop.permute.xlu0 %1032
  %v1035 = vadd.f32 %v1029, %v1033
  %v1036 = vtanh.pop %v1035
  %v1037 = vmul.f32 %v1028, %v1036
  %v1038 = vpack.c.bf16 %v1037, %v1037
  %1040 = vrot.lane.b32.xlu0 %v1038, 64
  %v1041 = vpop.permute.xlu0 %1040
  %v1043 = vsel %vm166, %v1041, 0
  %1045 = vmatpush.bf16.msra.mxu0 0
  %1046 = vmatpush.bf16.msra.mxu0 0
  %1047 = vmatpush.bf16.msra.mxu0 0
  %1048 = vmatpush.bf16.msra.mxu0 0
  %1049 = vmatpush.bf16.msra.mxu0 %v772
  %1050 = vmatpush.bf16.msra.mxu0 %v770
  %1051 = vmatpush.bf16.msra.mxu0 %v768
  %1052 = vmatpush.bf16.msra.mxu0 %v766
  %1053 = vmatmul.bf16.gmra.mxu0 %v1043
  %v1054 = vpop.f32.mrf.mxu0
  %v1055 = vadd.f32 0.0, %v1054
  %v1056 = vpop.f32.mrf.mxu0
  %1057 = vdwg.mxu0
  %1058 = vmatpush.bf16.msra.mxu0 0
  %1059 = vmatpush.bf16.msra.mxu0 0
  %1060 = vmatpush.bf16.msra.mxu0 0
  %1061 = vmatpush.bf16.msra.mxu0 0
  %1062 = vmatpush.bf16.msra.mxu0 %v773
  %1063 = vmatpush.bf16.msra.mxu0 %v771
  %1064 = vmatpush.bf16.msra.mxu0 %v769
  %1065 = vmatpush.bf16.msra.mxu0 %v767
  %1066 = vmatmul.bf16.gmra.mxu0 %v1043
  %v1067 = vpop.f32.mrf.mxu0
  %v1068 = vadd.f32 0.0, %v1067
  %v1069 = vpop.f32.mrf.mxu0
  %1070 = vdwg.mxu0
  %v1071 = vadd.f32 %v709, %v1055
  %v1072 = vadd.f32 %v710, %v1068
  %v1073 = vtanh.pop %v1071
  %v1074 = vtanh.pop %v1072
  %v1075 = vmul.f32 %v1073, 0.5
  %v1076 = vmul.f32 %v1074, 0.5
  %v1077 = vadd.f32 %v1075, 0.5
  %v1078 = vadd.f32 %v1076, 0.5
  %v1079 = vsel %vm109, %v1073, %v1077
  %v1080 = vsel %vm110, %v1074, %v1078
  %v1081 = vmul.f32 %v1079, %v1035
  %v1082 = vmul.f32 %v1079, %v1080
  %1084 = vrot.lane.b32.xlu0 %v1082, 64
  %v1085 = vpop.permute.xlu0 %1084
  %v1087 = vadd.f32 %v1081, %v1085
  %v1088 = vtanh.pop %v1087
  %v1089 = vmul.f32 %v1080, %v1088
  %v1090 = vpack.c.bf16 %v1089, %v1089
  %1092 = vrot.lane.b32.xlu0 %v1090, 64
  %v1093 = vpop.permute.xlu0 %1092
  %v1095 = vsel %vm166, %v1093, 0
  %1097 = vmatpush.bf16.msra.mxu0 0
  %1098 = vmatpush.bf16.msra.mxu0 0
  %1099 = vmatpush.bf16.msra.mxu0 0
  %1100 = vmatpush.bf16.msra.mxu0 0
  %1101 = vmatpush.bf16.msra.mxu0 %v772
  %1102 = vmatpush.bf16.msra.mxu0 %v770
  %1103 = vmatpush.bf16.msra.mxu0 %v768
  %1104 = vmatpush.bf16.msra.mxu0 %v766
  %1105 = vmatmul.bf16.gmra.mxu0 %v1095
  %v1106 = vpop.f32.mrf.mxu0
  %v1107 = vadd.f32 0.0, %v1106
  %v1108 = vpop.f32.mrf.mxu0
  %1109 = vdwg.mxu0
  %1110 = vmatpush.bf16.msra.mxu0 0
  %1111 = vmatpush.bf16.msra.mxu0 0
  %1112 = vmatpush.bf16.msra.mxu0 0
  %1113 = vmatpush.bf16.msra.mxu0 0
  %1114 = vmatpush.bf16.msra.mxu0 %v773
  %1115 = vmatpush.bf16.msra.mxu0 %v771
  %1116 = vmatpush.bf16.msra.mxu0 %v769
  %1117 = vmatpush.bf16.msra.mxu0 %v767
  %1118 = vmatmul.bf16.gmra.mxu0 %v1095
  %v1119 = vpop.f32.mrf.mxu0
  %v1120 = vadd.f32 0.0, %v1119
  %v1121 = vpop.f32.mrf.mxu0
  %1122 = vdwg.mxu0
  %v1123 = vadd.f32 %v711, %v1107
  %v1124 = vadd.f32 %v712, %v1120
  %v1125 = vtanh.pop %v1123
  %v1126 = vtanh.pop %v1124
  %v1127 = vmul.f32 %v1125, 0.5
  %v1128 = vmul.f32 %v1126, 0.5
  %v1129 = vadd.f32 %v1127, 0.5
  %v1130 = vadd.f32 %v1128, 0.5
  %v1131 = vsel %vm109, %v1125, %v1129
  %v1132 = vsel %vm110, %v1126, %v1130
  %v1133 = vmul.f32 %v1131, %v1087
  %v1134 = vmul.f32 %v1131, %v1132
  %1136 = vrot.lane.b32.xlu0 %v1134, 64
  %v1137 = vpop.permute.xlu0 %1136
  %v1139 = vadd.f32 %v1133, %v1137
  %v1140 = vtanh.pop %v1139
  %v1141 = vmul.f32 %v1132, %v1140
  %1143 = vrot.lane.b32.xlu0 %v737, 64
  %v1144 = vpop.permute.xlu0 %1143
  %1147 = vrot.lane.b32.xlu0 %v1141, 64
  %v1148 = vpop.permute.xlu0 %1147
  %v1150 = vsel %vm528, %v1144, %v1148
  %v1151 = vsel %vm528, %v1148, %v1144
  %1153 = vrot.lane.b32.xlu0 %v1151, 64
  %v1154 = vpop.permute.xlu0 %1153
  %v1156 = vsel %vm166, %v1150, %v1154
  %1157 = vst [vmem:[%s5] sm:$0xff] %v1156
  // Predicated region
  $region22: #{birnn_forward.1} parent=0 // pred_check
    _
  $region23: #{birnn_forward.1} parent=0 // pred_check_branch
    %1159 = sbr.rel (0) target = $region25
  $region24: #{birnn_forward.1} parent=0 // pred_region
    _
  $region25: #{birnn_forward.1} parent=0 // pred_fallthru
    _
  // Predicated region
  $region26: #{birnn_forward.1} parent=0 // pred_check
    _
  $region27: #{birnn_forward.1} parent=0 // pred_check_branch
    %1161 = sbr.rel (0) target = $region29
  $region28: #{birnn_forward.1} parent=0 // pred_region
    _
  $region29: #{birnn_forward.1} parent=0 // pred_fallthru
    _

</llo_original>
